<compile_context>
chip_gen: v7x
topology: tpu7x:2x2x1
jax: 0.10.0
libtpu: 0.0.40
codegen_flags: <defaults>
</compile_context>

<pallas_src>
import jax
import jax.numpy as jnp
from jax import lax
from jax.experimental import pallas as pl
from jax.experimental.pallas import tpu as pltpu


# ----------------------------- kernel -------------------------------------- #

def encoder_rnn_kernel(xf_ref, xb_ref, wxf_ref, wxb_ref, bxf_ref, bxb_ref,
                       wh_ref, bhn_ref, wo_avg_ref, wo_max_ref, bo_ref,
                       eps_ref, out_ref,
                       xpf_ref, xpb_ref, h_ref, sum_ref, max_ref):
    """Bidirectional 1-layer GRU + mean/max pooling + o2p + reparameterisation.

    Grid: 1-D over S-chunks (sequential recurrence -> "arbitrary").
      xf_ref : (T*Bp, H)  bf16, chunk c of the embedded sequence (forward)
      xb_ref : (T*Bp, H)  bf16, chunk C-1-c (backward direction's input)
      wxf/wxb: (H, GW)    bf16 input weights per direction, cols [r|z|n|pad]
      bxf/bxb: (1, GW)    f32 folded biases (b_ir+b_hr, b_iz+b_hz, b_in, pad)
      wh     : (2H, 2GW)  bf16 block-diagonal hidden weights (fwd rows->fwd cols)
      bhn    : (1, 2H)    f32 b_hn per direction (stays inside the r* term)
      wo_*   : (2H, 2O)   bf16 o2p row-slices for avg / max pooled features
      out    : (Bp, 3O)   f32 packed [mu | logvar | z], written at last chunk
    Scratch (persists across grid steps): xpf/xpb chunk input projections,
    h (Bp,2H), running sum (Bp,2H), running max (Bp,2H).
    """
    f32 = jnp.float32
    bf16 = jnp.bfloat16
    CB, H = xf_ref.shape
    Bp, O = eps_ref.shape
    T = CB // Bp                       # time steps per chunk
    GW = wxf_ref.shape[1]              # per-direction gate width (3H padded to 128)
    c = pl.program_id(0)
    nc = pl.num_programs(0)

    @pl.when(c == 0)
    def _init():
        h_ref[...] = jnp.zeros_like(h_ref)
        sum_ref[...] = jnp.zeros_like(sum_ref)
        max_ref[...] = jnp.full_like(max_ref, -jnp.inf)

    # Hoisted per-chunk input projections for both directions (bf16 MXU
    # operands, f32 accumulate). Not h-dependent -> off the serial chain.
    xpf_ref[...] = (jnp.dot(xf_ref[...], wxf_ref[...],
                            preferred_element_type=f32) + bxf_ref[...])
    xpb_ref[...] = (jnp.dot(xb_ref[...], wxb_ref[...],
                            preferred_element_type=f32) + bxb_ref[...])

    wh = wh_ref[...]                                        # (2H, 2GW) bf16
    bhn_f = jnp.broadcast_to(bhn_ref[:, :H], (Bp, H))       # hoisted broadcasts
    bhn_b = jnp.broadcast_to(bhn_ref[:, H:], (Bp, H))

    def step(t, carry):
        h, acc_sum, acc_max = carry
        # forward reads chunk-local step t; backward reads step T-1-t
        tf = pl.multiple_of(t * Bp, Bp)
        tb = pl.multiple_of((T - 1 - t) * Bp, Bp)
        xft = xpf_ref[pl.ds(tf, Bp), :]                     # (Bp, GW) f32
        xbt = xpb_ref[pl.ds(tb, Bp), :]

        # Single fused hidden matmul for both directions (2H <= 128).
        hp = jnp.dot(h.astype(bf16), wh, preferred_element_type=f32)
        hpf = hp[:, :GW]                                    # whole-vreg splits
        hpb = hp[:, GW:]

        # PyTorch GRU gate equations, per direction:
        #   r = sigmoid(W_ir x + b_ir + W_hr h + b_hr)
        #   z = sigmoid(W_iz x + b_iz + W_hz h + b_hz)
        #   n = tanh  (W_in x + b_in + r * (W_hn h + b_hn))
        #   h = (1 - z) * n + z * h
        rz_f = jax.nn.sigmoid(xft[:, :2 * H] + hpf[:, :2 * H])
        rz_b = jax.nn.sigmoid(xbt[:, :2 * H] + hpb[:, :2 * H])
        n_f = jnp.tanh(xft[:, 2 * H:3 * H]
                       + rz_f[:, :H] * (hpf[:, 2 * H:3 * H] + bhn_f))
        n_b = jnp.tanh(xbt[:, 2 * H:3 * H]
                       + rz_b[:, :H] * (hpb[:, 2 * H:3 * H] + bhn_b))
        z_f = rz_f[:, H:]
        z_b = rz_b[:, H:]
        h_f = (1.0 - z_f) * n_f + z_f * h[:, :H]
        h_b = (1.0 - z_b) * n_b + z_b * h[:, H:]
        h_new = jnp.concatenate([h_f, h_b], axis=1)         # (Bp, 2H) [f|b]
        return (h_new, acc_sum + h_new, jnp.maximum(acc_max, h_new))

    h, acc_sum, acc_max = lax.fori_loop(
        0, T, step, (h_ref[...], sum_ref[...], max_ref[...]), unroll=True)
    h_ref[...] = h
    sum_ref[...] = acc_sum
    max_ref[...] = acc_max

    @pl.when(c == nc - 1)
    def _finalize():
        s_total = T * nc
        avg = sum_ref[...] * (1.0 / s_total)                # (Bp, 2H) [avg_f|avg_b]
        # o2p feature order [avg_f | avg_b | max_f | max_b]; two partial matmuls
        # against row-slices of the fused (4H, 2O) weight (no feature concat).
        ps = (jnp.dot(avg.astype(bf16), wo_avg_ref[...],
                      preferred_element_type=f32)
              + jnp.dot(max_ref[...].astype(bf16), wo_max_ref[...],
                        preferred_element_type=f32)
              + bo_ref[...])                                # (Bp, 2O) [mu|logvar]
        mu = ps[:, :O]
        logvar = ps[:, O:]
        z_lat = mu + eps_ref[...] * jnp.exp(0.5 * logvar)
        out_ref[:, :2 * O] = ps                             # direct slice stores,
        out_ref[:, 2 * O:] = z_lat                          # no lane concat


# ----------------------------- wrapper -------------------------------------- #

def encoder_rnn_forward(tokens, params, eps, *, chunk=4):
    """tokens: (S, B) int32; returns (mu, logvar, z), each (B, output_size)."""
    # TODO(synk): the embedding row-gather stays in the JAX wrapper (an HBM
    # gather has no cheap in-kernel equivalent at this size).
    emb = params["embed"][tokens]                            # (S, B, H) f32
    S, B, H = emb.shape
    O = eps.shape[1]

    # Pad batch to a sublane multiple; padded rows are zero-input (finite h)
    # and are sliced off below.
    Bp = ((B + 7) // 8) * 8
    if Bp != B:
        emb = jnp.pad(emb, ((0, 0), (0, Bp - B), (0, 0)))
        eps = jnp.pad(eps, ((0, Bp - B), (0, 0)))

    x = emb.reshape(S * Bp, H).astype(jnp.bfloat16)          # bf16 MXU operand

    if S % chunk != 0:
        chunk = S                                            # single-chunk fallback
    C = S // chunk
    GW = params["wxf"].shape[1]
    H2 = params["wh"].shape[0]                               # 2H

    def full(a):
        return pl.BlockSpec(a.shape, lambda c, _nd=a.ndim: (0,) * _nd)

    in_specs = [
        pl.BlockSpec((chunk * Bp, H), lambda c: (c, 0)),         # fwd chunks
        pl.BlockSpec((chunk * Bp, H), lambda c: (C - 1 - c, 0)),  # bwd chunks
        full(params["wxf"]), full(params["wxb"]),
        full(params["bxf"]), full(params["bxb"]),
        full(params["wh"]), full(params["bhn"]),
        full(params["wo_avg"]), full(params["wo_max"]), full(params["bo"]),
        full(eps),
    ]
    out_specs = pl.BlockSpec((Bp, 3 * O), lambda c: (0, 0))
    scratch_shapes = [
        pltpu.VMEM((chunk * Bp, GW), jnp.float32),   # fwd chunk input proj
        pltpu.VMEM((chunk * Bp, GW), jnp.float32),   # bwd chunk input proj
        pltpu.VMEM((Bp, H2), jnp.float32),           # h   (persists across chunks)
        pltpu.VMEM((Bp, H2), jnp.float32),           # running sum
        pltpu.VMEM((Bp, H2), jnp.float32),           # running max
    ]

    flops = int(2 * 2 * S * Bp * H * GW              # hoisted input projections
                + 2 * S * Bp * H2 * 2 * GW           # per-step hidden matmul
                + 2 * 2 * Bp * H2 * 2 * O)           # o2p
    transc = int(S * Bp * 6 * H + Bp * O)
    bytes_acc = int(2 * x.size * x.dtype.itemsize
                    + sum(int(v.size) * v.dtype.itemsize
                          for k, v in params.items() if k != "embed")
                    + eps.size * 4 + Bp * 3 * O * 4)

    out = pl.pallas_call(
        encoder_rnn_kernel,
        out_shape=jax.ShapeDtypeStruct((Bp, 3 * O), jnp.float32),
        grid_spec=pltpu.PrefetchScalarGridSpec(
            num_scalar_prefetch=0,
            grid=(C,),
            in_specs=in_specs,
            out_specs=out_specs,
            scratch_shapes=scratch_shapes),
        compiler_params=pltpu.CompilerParams(
            dimension_semantics=("arbitrary",),      # sequential recurrence
            vmem_limit_bytes=16 * 1024 * 1024),      # explicit, fits v5e/v6e/v7x
        cost_estimate=pl.CostEstimate(flops=flops, transcendentals=transc,
                                      bytes_accessed=bytes_acc),
    )(x, x, params["wxf"], params["wxb"], params["bxf"], params["bxb"],
      params["wh"], params["bhn"], params["wo_avg"], params["wo_max"],
      params["bo"], eps)

    mu = out[:B, :O]
    logvar = out[:B, O:2 * O]
    z = out[:B, 2 * O:]
    return mu, logvar, z


# ------------------------- deterministic params ----------------------------- #

def init_params(key, vocab, hidden, output_size):
    """Per-gate params mirroring PyTorch nn.GRU / nn.Linear, stored (in, out)."""
    keys = iter(jax.random.split(key, 64))
    bound = 1.0 / jnp.sqrt(hidden)

    def u(shape):
        return jax.random.uniform(next(keys), shape, jnp.float32, -bound, bound)

    p = {"embed": jax.random.normal(next(keys), (vocab, hidden), jnp.float32)}
    for d in ("f", "b"):                                # forward / backward dir
        for name in ("wir", "wiz", "win", "whr", "whz", "whn"):
            p[f"{name}_{d}"] = u((hidden, hidden))       # stored transposed
        for name in ("bir", "biz", "bin", "bhr", "bhz", "bhn"):
            p[f"{name}_{d}"] = u((1, hidden))

    feat = 4 * hidden                                    # bidirectional avg+max
    lb = 1.0 / jnp.sqrt(feat)
    p["o2p_w"] = jax.random.uniform(next(keys), (feat, 2 * output_size),
                                    jnp.float32, -lb, lb)
    p["o2p_b"] = jax.random.uniform(next(keys), (1, 2 * output_size),
                                    jnp.float32, -lb, lb)
    return p


def pack_params(p, hidden):
    """Fuse per-gate / per-direction params into the kernel operand layout.

    Per-direction gate columns [r | z | n] padded to GW = roundup(3H, 128).
    Hidden weight wh is block-diagonal: rows 0:H (h_fwd) feed cols 0:GW,
    rows H:2H (h_bwd) feed cols GW:2GW. Weights are stored bf16 (MXU
    operands); biases stay f32.
    """
    H = hidden
    GW = ((3 * H + 127) // 128) * 128
    pad = GW - 3 * H
    bf16 = jnp.bfloat16

    def dir_wx(d):
        w = jnp.concatenate([p[f"wir_{d}"], p[f"wiz_{d}"], p[f"win_{d}"]], 1)
        return jnp.pad(w, ((0, 0), (0, pad))).astype(bf16)          # (H, GW)

    def dir_bx(d):
        # Fold b_ir+b_hr and b_iz+b_hz (plus b_in) into the hoisted projection;
        # b_hn must stay inside the r*(...) term, kept separately below.
        b = jnp.concatenate([p[f"bir_{d}"] + p[f"bhr_{d}"],
                             p[f"biz_{d}"] + p[f"bhz_{d}"],
                             p[f"bin_{d}"]], 1)
        return jnp.pad(b, ((0, 0), (0, pad)))                       # (1, GW) f32

    def dir_wh(d):
        w = jnp.concatenate([p[f"whr_{d}"], p[f"whz_{d}"], p[f"whn_{d}"]], 1)
        return jnp.pad(w, ((0, 0), (0, pad)))                       # (H, GW)

    zeros = jnp.zeros((H, GW), jnp.float32)
    wh = jnp.concatenate(
        [jnp.concatenate([dir_wh("f"), zeros], axis=1),
         jnp.concatenate([zeros, dir_wh("b")], axis=1)], axis=0).astype(bf16)

    bhn = jnp.concatenate([p["bhn_f"], p["bhn_b"]], axis=1)         # (1, 2H) f32

    return {
        "embed": p["embed"],
        "wxf": dir_wx("f"), "wxb": dir_wx("b"),
        "bxf": dir_bx("f"), "bxb": dir_bx("b"),
        "wh": wh, "bhn": bhn,
        # o2p weight rows are ordered [avg_f | avg_b | max_f | max_b]
        "wo_avg": p["o2p_w"][:2 * H].astype(bf16),
        "wo_max": p["o2p_w"][2 * H:].astype(bf16),
        "bo": p["o2p_b"],
    }


# --------------------------------- main -------------------------------------- #

if __name__ == "__main__":
    SEQ, BATCH = 8, 4
    VOCAB, HIDDEN, OUTPUT = 20, 32, 16

    root = jax.random.PRNGKey(0)
    k_tok, k_par, k_eps = jax.random.split(root, 3)

    tokens = jax.random.randint(k_tok, (SEQ, BATCH), 0, VOCAB, dtype=jnp.int32)
    raw = init_params(k_par, VOCAB, HIDDEN, OUTPUT)
    params = pack_params(raw, HIDDEN)
    eps = jax.random.normal(k_eps, (BATCH, OUTPUT), jnp.float32)

    mu, logvar, z = encoder_rnn_forward(tokens, params, eps, chunk=4)
    jax.block_until_ready((mu, logvar, z))

    assert mu.shape == (BATCH, OUTPUT)
    assert logvar.shape == (BATCH, OUTPUT)
    assert z.shape == (BATCH, OUTPUT)
    assert bool(jnp.all(jnp.isfinite(mu)))
    assert bool(jnp.all(jnp.isfinite(logvar)))
    assert bool(jnp.all(jnp.isfinite(z)))

    print("KERNEL_OK")
</pallas_src>

<mosaic_0001>
module attributes {stable_mosaic.version = 11 : i64} {
  func.func @encoder_rnn_kernel(%arg0: i32, %arg1: memref<32x32xbf16, #tpu.memory_space<vmem>>, %arg2: memref<32x32xbf16, #tpu.memory_space<vmem>>, %arg3: memref<32x128xbf16, #tpu.memory_space<vmem>>, %arg4: memref<32x128xbf16, #tpu.memory_space<vmem>>, %arg5: memref<1x128xf32, #tpu.memory_space<vmem>>, %arg6: memref<1x128xf32, #tpu.memory_space<vmem>>, %arg7: memref<64x256xbf16, #tpu.memory_space<vmem>>, %arg8: memref<1x64xf32, #tpu.memory_space<vmem>>, %arg9: memref<64x32xbf16, #tpu.memory_space<vmem>>, %arg10: memref<64x32xbf16, #tpu.memory_space<vmem>>, %arg11: memref<1x32xf32, #tpu.memory_space<vmem>>, %arg12: memref<8x16xf32, #tpu.memory_space<vmem>>, %arg13: memref<8x48xf32, #tpu.memory_space<vmem>>, %arg14: memref<32x128xf32, #tpu.memory_space<vmem>>, %arg15: memref<32x128xf32, #tpu.memory_space<vmem>>, %arg16: memref<8x64xf32, #tpu.memory_space<vmem>>, %arg17: memref<8x64xf32, #tpu.memory_space<vmem>>, %arg18: memref<8x64xf32, #tpu.memory_space<vmem>>) attributes {dimension_semantics = [#tpu.dimension_semantics<arbitrary>], iteration_bounds = array<i64: 2>, scalar_prefetch = 0 : i64, scratch_operands = 5 : i64, tpu.core_type = #tpu.core_type<tc>, window_params = [{transform_indices = @transform_0, window_bounds = array<i64: 32, 32>}, {transform_indices = @transform_1, window_bounds = array<i64: 32, 32>}, {pipeline_mode = #tpu.pipeline_mode<synchronous>, transform_indices = @transform_2, window_bounds = array<i64: 32, 128>}, {pipeline_mode = #tpu.pipeline_mode<synchronous>, transform_indices = @transform_3, window_bounds = array<i64: 32, 128>}, {pipeline_mode = #tpu.pipeline_mode<synchronous>, transform_indices = @transform_4, window_bounds = array<i64: 1, 128>}, {pipeline_mode = #tpu.pipeline_mode<synchronous>, transform_indices = @transform_5, window_bounds = array<i64: 1, 128>}, {pipeline_mode = #tpu.pipeline_mode<synchronous>, transform_indices = @transform_6, window_bounds = array<i64: 64, 256>}, {pipeline_mode = #tpu.pipeline_mode<synchronous>, transform_indices = @transform_7, window_bounds = array<i64: 1, 64>}, {pipeline_mode = #tpu.pipeline_mode<synchronous>, transform_indices = @transform_8, window_bounds = array<i64: 64, 32>}, {pipeline_mode = #tpu.pipeline_mode<synchronous>, transform_indices = @transform_9, window_bounds = array<i64: 64, 32>}, {pipeline_mode = #tpu.pipeline_mode<synchronous>, transform_indices = @transform_10, window_bounds = array<i64: 1, 32>}, {pipeline_mode = #tpu.pipeline_mode<synchronous>, transform_indices = @transform_11, window_bounds = array<i64: 8, 16>}, {pipeline_mode = #tpu.pipeline_mode<synchronous>, transform_indices = @transform_12, window_bounds = array<i64: 8, 48>}]} {
    %c0_i32 = arith.constant 0 : i32
    %0 = arith.cmpi eq, %arg0, %c0_i32 : i32
    %1 = arith.extui %0 : i1 to i32
    %c0_i32_0 = arith.constant 0 : i32
    %2 = arith.cmpi ne, %1, %c0_i32_0 : i32
    scf.if %2 {
      %cst_76 = arith.constant 0.000000e+00 : f32
      %273 = vector.broadcast %cst_76 : f32 to vector<8x64xf32>
      %c0_77 = arith.constant 0 : index
      %c0_78 = arith.constant 0 : index
      %274 = vector.load %arg16[%c0_77, %c0_78] : memref<8x64xf32, #tpu.memory_space<vmem>>, vector<8x64xf32>
      tpu.vector_store %arg16[%c0_77, %c0_78], %273 {strides = array<i32>} : memref<8x64xf32, #tpu.memory_space<vmem>>, vector<8x64xf32>,
      %cst_79 = arith.constant 0.000000e+00 : f32
      %275 = vector.broadcast %cst_79 : f32 to vector<8x64xf32>
      %c0_80 = arith.constant 0 : index
      %c0_81 = arith.constant 0 : index
      %276 = vector.load %arg17[%c0_80, %c0_81] : memref<8x64xf32, #tpu.memory_space<vmem>>, vector<8x64xf32>
      tpu.vector_store %arg17[%c0_80, %c0_81], %275 {strides = array<i32>} : memref<8x64xf32, #tpu.memory_space<vmem>>, vector<8x64xf32>,
      %cst_82 = arith.constant 0xFF800000 : f32
      %277 = vector.broadcast %cst_82 : f32 to vector<8x64xf32>
      %c0_83 = arith.constant 0 : index
      %c0_84 = arith.constant 0 : index
      %278 = vector.load %arg18[%c0_83, %c0_84] : memref<8x64xf32, #tpu.memory_space<vmem>>, vector<8x64xf32>
      tpu.vector_store %arg18[%c0_83, %c0_84], %277 {strides = array<i32>} : memref<8x64xf32, #tpu.memory_space<vmem>>, vector<8x64xf32>,
    } else {
    }
    %c0 = arith.constant 0 : index
    %c0_1 = arith.constant 0 : index
    %3 = vector.load %arg1[%c0, %c0_1] : memref<32x32xbf16, #tpu.memory_space<vmem>>, vector<32x32xbf16>
    %c0_2 = arith.constant 0 : index
    %c0_3 = arith.constant 0 : index
    %4 = vector.load %arg3[%c0_2, %c0_3] : memref<32x128xbf16, #tpu.memory_space<vmem>>, vector<32x128xbf16>
    %cst = arith.constant dense<0.000000e+00> : vector<32x128xf32>
    %5 = tpu.matmul %3, %4, %cst {dimension_numbers = #tpu.dot_dimension_numbers<[1], [0], [0], [1], [0, 0, 1, 1], [], []>} : vector<32x32xbf16>, vector<32x128xbf16>, vector<32x128xf32> -> vector<32x128xf32>
    %c0_4 = arith.constant 0 : index
    %c0_5 = arith.constant 0 : index
    %6 = vector.load %arg5[%c0_4, %c0_5] : memref<1x128xf32, #tpu.memory_space<vmem>>, vector<1x128xf32>
    %7 = vector.broadcast %6 : vector<1x128xf32> to vector<32x128xf32>
    %8 = arith.addf %5, %7 : vector<32x128xf32>
    %c0_6 = arith.constant 0 : index
    %c0_7 = arith.constant 0 : index
    %9 = vector.load %arg14[%c0_6, %c0_7] : memref<32x128xf32, #tpu.memory_space<vmem>>, vector<32x128xf32>
    tpu.vector_store %arg14[%c0_6, %c0_7], %8 {strides = array<i32>} : memref<32x128xf32, #tpu.memory_space<vmem>>, vector<32x128xf32>,
    %c0_8 = arith.constant 0 : index
    %c0_9 = arith.constant 0 : index
    %10 = vector.load %arg2[%c0_8, %c0_9] : memref<32x32xbf16, #tpu.memory_space<vmem>>, vector<32x32xbf16>
    %c0_10 = arith.constant 0 : index
    %c0_11 = arith.constant 0 : index
    %11 = vector.load %arg4[%c0_10, %c0_11] : memref<32x128xbf16, #tpu.memory_space<vmem>>, vector<32x128xbf16>
    %cst_12 = arith.constant dense<0.000000e+00> : vector<32x128xf32>
    %12 = tpu.matmul %10, %11, %cst_12 {dimension_numbers = #tpu.dot_dimension_numbers<[1], [0], [0], [1], [0, 0, 1, 1], [], []>} : vector<32x32xbf16>, vector<32x128xbf16>, vector<32x128xf32> -> vector<32x128xf32>
    %c0_13 = arith.constant 0 : index
    %c0_14 = arith.constant 0 : index
    %13 = vector.load %arg6[%c0_13, %c0_14] : memref<1x128xf32, #tpu.memory_space<vmem>>, vector<1x128xf32>
    %14 = vector.broadcast %13 : vector<1x128xf32> to vector<32x128xf32>
    %15 = arith.addf %12, %14 : vector<32x128xf32>
    %c0_15 = arith.constant 0 : index
    %c0_16 = arith.constant 0 : index
    %16 = vector.load %arg15[%c0_15, %c0_16] : memref<32x128xf32, #tpu.memory_space<vmem>>, vector<32x128xf32>
    tpu.vector_store %arg15[%c0_15, %c0_16], %15 {strides = array<i32>} : memref<32x128xf32, #tpu.memory_space<vmem>>, vector<32x128xf32>,
    %c0_17 = arith.constant 0 : index
    %c0_18 = arith.constant 0 : index
    %17 = vector.load %arg7[%c0_17, %c0_18] : memref<64x256xbf16, #tpu.memory_space<vmem>>, vector<64x256xbf16>
    %c0_19 = arith.constant 0 : index
    %c0_20 = arith.constant 0 : index
    %18 = vector.load %arg8[%c0_19, %c0_20] : memref<1x64xf32, #tpu.memory_space<vmem>>, vector<1x32xf32>
    %19 = vector.shape_cast %18 : vector<1x32xf32> to vector<1x32xf32>
    %20 = vector.broadcast %19 : vector<1x32xf32> to vector<8x32xf32>
    %c0_21 = arith.constant 0 : index
    %c32 = arith.constant 32 : index
    %21 = vector.load %arg8[%c0_21, %c32] : memref<1x64xf32, #tpu.memory_space<vmem>>, vector<1x32xf32>
    %22 = vector.shape_cast %21 : vector<1x32xf32> to vector<1x32xf32>
    %23 = vector.broadcast %22 : vector<1x32xf32> to vector<8x32xf32>
    %c0_22 = arith.constant 0 : index
    %c0_23 = arith.constant 0 : index
    %24 = vector.load %arg16[%c0_22, %c0_23] : memref<8x64xf32, #tpu.memory_space<vmem>>, vector<8x64xf32>
    %c0_24 = arith.constant 0 : index
    %c0_25 = arith.constant 0 : index
    %25 = vector.load %arg17[%c0_24, %c0_25] : memref<8x64xf32, #tpu.memory_space<vmem>>, vector<8x64xf32>
    %c0_26 = arith.constant 0 : index
    %c0_27 = arith.constant 0 : index
    %26 = vector.load %arg18[%c0_26, %c0_27] : memref<8x64xf32, #tpu.memory_space<vmem>>, vector<8x64xf32>
    %c0_i32_28 = arith.constant 0 : i32
    %c8_i32 = arith.constant 8 : i32
    %27 = arith.muli %c0_i32_28, %c8_i32 : i32
    %28 = tpu.assume_multiple %27, 8 : i32
    %c3_i32 = arith.constant 3 : i32
    %29 = arith.subi %c3_i32, %c0_i32_28 : i32
    %c8_i32_29 = arith.constant 8 : i32
    %30 = arith.muli %29, %c8_i32_29 : i32
    %31 = tpu.assume_multiple %30, 8 : i32
    %32 = arith.index_cast %28 : i32 to index
    %c0_30 = arith.constant 0 : index
    %33 = vector.load %arg14[%32, %c0_30] : memref<32x128xf32, #tpu.memory_space<vmem>>, vector<8x128xf32>
    %34 = arith.index_cast %31 : i32 to index
    %c0_31 = arith.constant 0 : index
    %35 = vector.load %arg15[%34, %c0_31] : memref<32x128xf32, #tpu.memory_space<vmem>>, vector<8x128xf32>
    %36 = arith.truncf %24 : vector<8x64xf32> to vector<8x64xbf16>
    %cst_32 = arith.constant dense<0.000000e+00> : vector<8x256xf32>
    %37 = tpu.matmul %36, %17, %cst_32 {dimension_numbers = #tpu.dot_dimension_numbers<[1], [0], [0], [1], [0, 0, 1, 1], [], []>} : vector<8x64xbf16>, vector<64x256xbf16>, vector<8x256xf32> -> vector<8x256xf32>
    %38 = vector.extract_strided_slice %37 {offsets = [0, 0], sizes = [8, 128], strides = [1, 1]} : vector<8x256xf32> to vector<8x128xf32>
    %39 = vector.extract_strided_slice %37 {offsets = [0, 128], sizes = [8, 128], strides = [1, 1]} : vector<8x256xf32> to vector<8x128xf32>
    %40 = vector.extract_strided_slice %33 {offsets = [0, 0], sizes = [8, 64], strides = [1, 1]} : vector<8x128xf32> to vector<8x64xf32>
    %41 = vector.extract_strided_slice %38 {offsets = [0, 0], sizes = [8, 64], strides = [1, 1]} : vector<8x128xf32> to vector<8x64xf32>
    %42 = arith.addf %40, %41 : vector<8x64xf32>
    %43 = arith.negf %42 : vector<8x64xf32>
    %44 = math.exp %43 : vector<8x64xf32>
    %cst_33 = arith.constant 1.000000e+00 : f32
    %45 = vector.broadcast %cst_33 : f32 to vector<8x64xf32>
    %46 = arith.addf %45, %44 : vector<8x64xf32>
    %47 = arith.divf %45, %46 : vector<8x64xf32>
    %48 = vector.extract_strided_slice %35 {offsets = [0, 0], sizes = [8, 64], strides = [1, 1]} : vector<8x128xf32> to vector<8x64xf32>
    %49 = vector.extract_strided_slice %39 {offsets = [0, 0], sizes = [8, 64], strides = [1, 1]} : vector<8x128xf32> to vector<8x64xf32>
    %50 = arith.addf %48, %49 : vector<8x64xf32>
    %51 = arith.negf %50 : vector<8x64xf32>
    %52 = math.exp %51 : vector<8x64xf32>
    %cst_34 = arith.constant 1.000000e+00 : f32
    %53 = vector.broadcast %cst_34 : f32 to vector<8x64xf32>
    %54 = arith.addf %53, %52 : vector<8x64xf32>
    %55 = arith.divf %53, %54 : vector<8x64xf32>
    %56 = vector.extract_strided_slice %33 {offsets = [0, 64], sizes = [8, 32], strides = [1, 1]} : vector<8x128xf32> to vector<8x32xf32>
    %57 = vector.extract_strided_slice %47 {offsets = [0, 0], sizes = [8, 32], strides = [1, 1]} : vector<8x64xf32> to vector<8x32xf32>
    %58 = vector.extract_strided_slice %38 {offsets = [0, 64], sizes = [8, 32], strides = [1, 1]} : vector<8x128xf32> to vector<8x32xf32>
    %59 = arith.addf %58, %20 : vector<8x32xf32>
    %60 = arith.mulf %57, %59 : vector<8x32xf32>
    %61 = arith.addf %56, %60 : vector<8x32xf32>
    %62 = math.tanh %61 : vector<8x32xf32>
    %63 = vector.extract_strided_slice %35 {offsets = [0, 64], sizes = [8, 32], strides = [1, 1]} : vector<8x128xf32> to vector<8x32xf32>
    %64 = vector.extract_strided_slice %55 {offsets = [0, 0], sizes = [8, 32], strides = [1, 1]} : vector<8x64xf32> to vector<8x32xf32>
    %65 = vector.extract_strided_slice %39 {offsets = [0, 64], sizes = [8, 32], strides = [1, 1]} : vector<8x128xf32> to vector<8x32xf32>
    %66 = arith.addf %65, %23 : vector<8x32xf32>
    %67 = arith.mulf %64, %66 : vector<8x32xf32>
    %68 = arith.addf %63, %67 : vector<8x32xf32>
    %69 = math.tanh %68 : vector<8x32xf32>
    %70 = vector.extract_strided_slice %47 {offsets = [0, 32], sizes = [8, 32], strides = [1, 1]} : vector<8x64xf32> to vector<8x32xf32>
    %71 = vector.extract_strided_slice %55 {offsets = [0, 32], sizes = [8, 32], strides = [1, 1]} : vector<8x64xf32> to vector<8x32xf32>
    %cst_35 = arith.constant 1.000000e+00 : f32
    %72 = vector.broadcast %cst_35 : f32 to vector<8x32xf32>
    %73 = arith.subf %72, %70 : vector<8x32xf32>
    %74 = arith.mulf %73, %62 : vector<8x32xf32>
    %75 = vector.extract_strided_slice %24 {offsets = [0, 0], sizes = [8, 32], strides = [1, 1]} : vector<8x64xf32> to vector<8x32xf32>
    %76 = arith.mulf %70, %75 : vector<8x32xf32>
    %77 = arith.addf %74, %76 : vector<8x32xf32>
    %cst_36 = arith.constant 1.000000e+00 : f32
    %78 = vector.broadcast %cst_36 : f32 to vector<8x32xf32>
    %79 = arith.subf %78, %71 : vector<8x32xf32>
    %80 = arith.mulf %79, %69 : vector<8x32xf32>
    %81 = vector.extract_strided_slice %24 {offsets = [0, 32], sizes = [8, 32], strides = [1, 1]} : vector<8x64xf32> to vector<8x32xf32>
    %82 = arith.mulf %71, %81 : vector<8x32xf32>
    %83 = arith.addf %80, %82 : vector<8x32xf32>
    %84 = tpu.concatenate %77, %83 in 1 : vector<8x32xf32>, vector<8x32xf32> -> vector<8x64xf32>
    %85 = arith.addf %25, %84 : vector<8x64xf32>
    %86 = arith.maximumf %26, %84 : vector<8x64xf32>
    %c1_i32 = arith.constant 1 : i32
    %c8_i32_37 = arith.constant 8 : i32
    %87 = arith.muli %c1_i32, %c8_i32_37 : i32
    %88 = tpu.assume_multiple %87, 8 : i32
    %c3_i32_38 = arith.constant 3 : i32
    %89 = arith.subi %c3_i32_38, %c1_i32 : i32
    %c8_i32_39 = arith.constant 8 : i32
    %90 = arith.muli %89, %c8_i32_39 : i32
    %91 = tpu.assume_multiple %90, 8 : i32
    %92 = arith.index_cast %88 : i32 to index
    %c0_40 = arith.constant 0 : index
    %93 = vector.load %arg14[%92, %c0_40] : memref<32x128xf32, #tpu.memory_space<vmem>>, vector<8x128xf32>
    %94 = arith.index_cast %91 : i32 to index
    %c0_41 = arith.constant 0 : index
    %95 = vector.load %arg15[%94, %c0_41] : memref<32x128xf32, #tpu.memory_space<vmem>>, vector<8x128xf32>
    %96 = arith.truncf %84 : vector<8x64xf32> to vector<8x64xbf16>
    %cst_42 = arith.constant dense<0.000000e+00> : vector<8x256xf32>
    %97 = tpu.matmul %96, %17, %cst_42 {dimension_numbers = #tpu.dot_dimension_numbers<[1], [0], [0], [1], [0, 0, 1, 1], [], []>} : vector<8x64xbf16>, vector<64x256xbf16>, vector<8x256xf32> -> vector<8x256xf32>
    %98 = vector.extract_strided_slice %97 {offsets = [0, 0], sizes = [8, 128], strides = [1, 1]} : vector<8x256xf32> to vector<8x128xf32>
    %99 = vector.extract_strided_slice %97 {offsets = [0, 128], sizes = [8, 128], strides = [1, 1]} : vector<8x256xf32> to vector<8x128xf32>
    %100 = vector.extract_strided_slice %93 {offsets = [0, 0], sizes = [8, 64], strides = [1, 1]} : vector<8x128xf32> to vector<8x64xf32>
    %101 = vector.extract_strided_slice %98 {offsets = [0, 0], sizes = [8, 64], strides = [1, 1]} : vector<8x128xf32> to vector<8x64xf32>
    %102 = arith.addf %100, %101 : vector<8x64xf32>
    %103 = arith.negf %102 : vector<8x64xf32>
    %104 = math.exp %103 : vector<8x64xf32>
    %cst_43 = arith.constant 1.000000e+00 : f32
    %105 = vector.broadcast %cst_43 : f32 to vector<8x64xf32>
    %106 = arith.addf %105, %104 : vector<8x64xf32>
    %107 = arith.divf %105, %106 : vector<8x64xf32>
    %108 = vector.extract_strided_slice %95 {offsets = [0, 0], sizes = [8, 64], strides = [1, 1]} : vector<8x128xf32> to vector<8x64xf32>
    %109 = vector.extract_strided_slice %99 {offsets = [0, 0], sizes = [8, 64], strides = [1, 1]} : vector<8x128xf32> to vector<8x64xf32>
    %110 = arith.addf %108, %109 : vector<8x64xf32>
    %111 = arith.negf %110 : vector<8x64xf32>
    %112 = math.exp %111 : vector<8x64xf32>
    %cst_44 = arith.constant 1.000000e+00 : f32
    %113 = vector.broadcast %cst_44 : f32 to vector<8x64xf32>
    %114 = arith.addf %113, %112 : vector<8x64xf32>
    %115 = arith.divf %113, %114 : vector<8x64xf32>
    %116 = vector.extract_strided_slice %93 {offsets = [0, 64], sizes = [8, 32], strides = [1, 1]} : vector<8x128xf32> to vector<8x32xf32>
    %117 = vector.extract_strided_slice %107 {offsets = [0, 0], sizes = [8, 32], strides = [1, 1]} : vector<8x64xf32> to vector<8x32xf32>
    %118 = vector.extract_strided_slice %98 {offsets = [0, 64], sizes = [8, 32], strides = [1, 1]} : vector<8x128xf32> to vector<8x32xf32>
    %119 = arith.addf %118, %20 : vector<8x32xf32>
    %120 = arith.mulf %117, %119 : vector<8x32xf32>
    %121 = arith.addf %116, %120 : vector<8x32xf32>
    %122 = math.tanh %121 : vector<8x32xf32>
    %123 = vector.extract_strided_slice %95 {offsets = [0, 64], sizes = [8, 32], strides = [1, 1]} : vector<8x128xf32> to vector<8x32xf32>
    %124 = vector.extract_strided_slice %115 {offsets = [0, 0], sizes = [8, 32], strides = [1, 1]} : vector<8x64xf32> to vector<8x32xf32>
    %125 = vector.extract_strided_slice %99 {offsets = [0, 64], sizes = [8, 32], strides = [1, 1]} : vector<8x128xf32> to vector<8x32xf32>
    %126 = arith.addf %125, %23 : vector<8x32xf32>
    %127 = arith.mulf %124, %126 : vector<8x32xf32>
    %128 = arith.addf %123, %127 : vector<8x32xf32>
    %129 = math.tanh %128 : vector<8x32xf32>
    %130 = vector.extract_strided_slice %107 {offsets = [0, 32], sizes = [8, 32], strides = [1, 1]} : vector<8x64xf32> to vector<8x32xf32>
    %131 = vector.extract_strided_slice %115 {offsets = [0, 32], sizes = [8, 32], strides = [1, 1]} : vector<8x64xf32> to vector<8x32xf32>
    %cst_45 = arith.constant 1.000000e+00 : f32
    %132 = vector.broadcast %cst_45 : f32 to vector<8x32xf32>
    %133 = arith.subf %132, %130 : vector<8x32xf32>
    %134 = arith.mulf %133, %122 : vector<8x32xf32>
    %135 = vector.extract_strided_slice %84 {offsets = [0, 0], sizes = [8, 32], strides = [1, 1]} : vector<8x64xf32> to vector<8x32xf32>
    %136 = arith.mulf %130, %135 : vector<8x32xf32>
    %137 = arith.addf %134, %136 : vector<8x32xf32>
    %cst_46 = arith.constant 1.000000e+00 : f32
    %138 = vector.broadcast %cst_46 : f32 to vector<8x32xf32>
    %139 = arith.subf %138, %131 : vector<8x32xf32>
    %140 = arith.mulf %139, %129 : vector<8x32xf32>
    %141 = vector.extract_strided_slice %84 {offsets = [0, 32], sizes = [8, 32], strides = [1, 1]} : vector<8x64xf32> to vector<8x32xf32>
    %142 = arith.mulf %131, %141 : vector<8x32xf32>
    %143 = arith.addf %140, %142 : vector<8x32xf32>
    %144 = tpu.concatenate %137, %143 in 1 : vector<8x32xf32>, vector<8x32xf32> -> vector<8x64xf32>
    %145 = arith.addf %85, %144 : vector<8x64xf32>
    %146 = arith.maximumf %86, %144 : vector<8x64xf32>
    %c2_i32 = arith.constant 2 : i32
    %c8_i32_47 = arith.constant 8 : i32
    %147 = arith.muli %c2_i32, %c8_i32_47 : i32
    %148 = tpu.assume_multiple %147, 8 : i32
    %c3_i32_48 = arith.constant 3 : i32
    %149 = arith.subi %c3_i32_48, %c2_i32 : i32
    %c8_i32_49 = arith.constant 8 : i32
    %150 = arith.muli %149, %c8_i32_49 : i32
    %151 = tpu.assume_multiple %150, 8 : i32
    %152 = arith.index_cast %148 : i32 to index
    %c0_50 = arith.constant 0 : index
    %153 = vector.load %arg14[%152, %c0_50] : memref<32x128xf32, #tpu.memory_space<vmem>>, vector<8x128xf32>
    %154 = arith.index_cast %151 : i32 to index
    %c0_51 = arith.constant 0 : index
    %155 = vector.load %arg15[%154, %c0_51] : memref<32x128xf32, #tpu.memory_space<vmem>>, vector<8x128xf32>
    %156 = arith.truncf %144 : vector<8x64xf32> to vector<8x64xbf16>
    %cst_52 = arith.constant dense<0.000000e+00> : vector<8x256xf32>
    %157 = tpu.matmul %156, %17, %cst_52 {dimension_numbers = #tpu.dot_dimension_numbers<[1], [0], [0], [1], [0, 0, 1, 1], [], []>} : vector<8x64xbf16>, vector<64x256xbf16>, vector<8x256xf32> -> vector<8x256xf32>
    %158 = vector.extract_strided_slice %157 {offsets = [0, 0], sizes = [8, 128], strides = [1, 1]} : vector<8x256xf32> to vector<8x128xf32>
    %159 = vector.extract_strided_slice %157 {offsets = [0, 128], sizes = [8, 128], strides = [1, 1]} : vector<8x256xf32> to vector<8x128xf32>
    %160 = vector.extract_strided_slice %153 {offsets = [0, 0], sizes = [8, 64], strides = [1, 1]} : vector<8x128xf32> to vector<8x64xf32>
    %161 = vector.extract_strided_slice %158 {offsets = [0, 0], sizes = [8, 64], strides = [1, 1]} : vector<8x128xf32> to vector<8x64xf32>
    %162 = arith.addf %160, %161 : vector<8x64xf32>
    %163 = arith.negf %162 : vector<8x64xf32>
    %164 = math.exp %163 : vector<8x64xf32>
    %cst_53 = arith.constant 1.000000e+00 : f32
    %165 = vector.broadcast %cst_53 : f32 to vector<8x64xf32>
    %166 = arith.addf %165, %164 : vector<8x64xf32>
    %167 = arith.divf %165, %166 : vector<8x64xf32>
    %168 = vector.extract_strided_slice %155 {offsets = [0, 0], sizes = [8, 64], strides = [1, 1]} : vector<8x128xf32> to vector<8x64xf32>
    %169 = vector.extract_strided_slice %159 {offsets = [0, 0], sizes = [8, 64], strides = [1, 1]} : vector<8x128xf32> to vector<8x64xf32>
    %170 = arith.addf %168, %169 : vector<8x64xf32>
    %171 = arith.negf %170 : vector<8x64xf32>
    %172 = math.exp %171 : vector<8x64xf32>
    %cst_54 = arith.constant 1.000000e+00 : f32
    %173 = vector.broadcast %cst_54 : f32 to vector<8x64xf32>
    %174 = arith.addf %173, %172 : vector<8x64xf32>
    %175 = arith.divf %173, %174 : vector<8x64xf32>
    %176 = vector.extract_strided_slice %153 {offsets = [0, 64], sizes = [8, 32], strides = [1, 1]} : vector<8x128xf32> to vector<8x32xf32>
    %177 = vector.extract_strided_slice %167 {offsets = [0, 0], sizes = [8, 32], strides = [1, 1]} : vector<8x64xf32> to vector<8x32xf32>
    %178 = vector.extract_strided_slice %158 {offsets = [0, 64], sizes = [8, 32], strides = [1, 1]} : vector<8x128xf32> to vector<8x32xf32>
    %179 = arith.addf %178, %20 : vector<8x32xf32>
    %180 = arith.mulf %177, %179 : vector<8x32xf32>
    %181 = arith.addf %176, %180 : vector<8x32xf32>
    %182 = math.tanh %181 : vector<8x32xf32>
    %183 = vector.extract_strided_slice %155 {offsets = [0, 64], sizes = [8, 32], strides = [1, 1]} : vector<8x128xf32> to vector<8x32xf32>
    %184 = vector.extract_strided_slice %175 {offsets = [0, 0], sizes = [8, 32], strides = [1, 1]} : vector<8x64xf32> to vector<8x32xf32>
    %185 = vector.extract_strided_slice %159 {offsets = [0, 64], sizes = [8, 32], strides = [1, 1]} : vector<8x128xf32> to vector<8x32xf32>
    %186 = arith.addf %185, %23 : vector<8x32xf32>
    %187 = arith.mulf %184, %186 : vector<8x32xf32>
    %188 = arith.addf %183, %187 : vector<8x32xf32>
    %189 = math.tanh %188 : vector<8x32xf32>
    %190 = vector.extract_strided_slice %167 {offsets = [0, 32], sizes = [8, 32], strides = [1, 1]} : vector<8x64xf32> to vector<8x32xf32>
    %191 = vector.extract_strided_slice %175 {offsets = [0, 32], sizes = [8, 32], strides = [1, 1]} : vector<8x64xf32> to vector<8x32xf32>
    %cst_55 = arith.constant 1.000000e+00 : f32
    %192 = vector.broadcast %cst_55 : f32 to vector<8x32xf32>
    %193 = arith.subf %192, %190 : vector<8x32xf32>
    %194 = arith.mulf %193, %182 : vector<8x32xf32>
    %195 = vector.extract_strided_slice %144 {offsets = [0, 0], sizes = [8, 32], strides = [1, 1]} : vector<8x64xf32> to vector<8x32xf32>
    %196 = arith.mulf %190, %195 : vector<8x32xf32>
    %197 = arith.addf %194, %196 : vector<8x32xf32>
    %cst_56 = arith.constant 1.000000e+00 : f32
    %198 = vector.broadcast %cst_56 : f32 to vector<8x32xf32>
    %199 = arith.subf %198, %191 : vector<8x32xf32>
    %200 = arith.mulf %199, %189 : vector<8x32xf32>
    %201 = vector.extract_strided_slice %144 {offsets = [0, 32], sizes = [8, 32], strides = [1, 1]} : vector<8x64xf32> to vector<8x32xf32>
    %202 = arith.mulf %191, %201 : vector<8x32xf32>
    %203 = arith.addf %200, %202 : vector<8x32xf32>
    %204 = tpu.concatenate %197, %203 in 1 : vector<8x32xf32>, vector<8x32xf32> -> vector<8x64xf32>
    %205 = arith.addf %145, %204 : vector<8x64xf32>
    %206 = arith.maximumf %146, %204 : vector<8x64xf32>
    %c3_i32_57 = arith.constant 3 : i32
    %c8_i32_58 = arith.constant 8 : i32
    %207 = arith.muli %c3_i32_57, %c8_i32_58 : i32
    %208 = tpu.assume_multiple %207, 8 : i32
    %c3_i32_59 = arith.constant 3 : i32
    %209 = arith.subi %c3_i32_59, %c3_i32_57 : i32
    %c8_i32_60 = arith.constant 8 : i32
    %210 = arith.muli %209, %c8_i32_60 : i32
    %211 = tpu.assume_multiple %210, 8 : i32
    %212 = arith.index_cast %208 : i32 to index
    %c0_61 = arith.constant 0 : index
    %213 = vector.load %arg14[%212, %c0_61] : memref<32x128xf32, #tpu.memory_space<vmem>>, vector<8x128xf32>
    %214 = arith.index_cast %211 : i32 to index
    %c0_62 = arith.constant 0 : index
    %215 = vector.load %arg15[%214, %c0_62] : memref<32x128xf32, #tpu.memory_space<vmem>>, vector<8x128xf32>
    %216 = arith.truncf %204 : vector<8x64xf32> to vector<8x64xbf16>
    %cst_63 = arith.constant dense<0.000000e+00> : vector<8x256xf32>
    %217 = tpu.matmul %216, %17, %cst_63 {dimension_numbers = #tpu.dot_dimension_numbers<[1], [0], [0], [1], [0, 0, 1, 1], [], []>} : vector<8x64xbf16>, vector<64x256xbf16>, vector<8x256xf32> -> vector<8x256xf32>
    %218 = vector.extract_strided_slice %217 {offsets = [0, 0], sizes = [8, 128], strides = [1, 1]} : vector<8x256xf32> to vector<8x128xf32>
    %219 = vector.extract_strided_slice %217 {offsets = [0, 128], sizes = [8, 128], strides = [1, 1]} : vector<8x256xf32> to vector<8x128xf32>
    %220 = vector.extract_strided_slice %213 {offsets = [0, 0], sizes = [8, 64], strides = [1, 1]} : vector<8x128xf32> to vector<8x64xf32>
    %221 = vector.extract_strided_slice %218 {offsets = [0, 0], sizes = [8, 64], strides = [1, 1]} : vector<8x128xf32> to vector<8x64xf32>
    %222 = arith.addf %220, %221 : vector<8x64xf32>
    %223 = arith.negf %222 : vector<8x64xf32>
    %224 = math.exp %223 : vector<8x64xf32>
    %cst_64 = arith.constant 1.000000e+00 : f32
    %225 = vector.broadcast %cst_64 : f32 to vector<8x64xf32>
    %226 = arith.addf %225, %224 : vector<8x64xf32>
    %227 = arith.divf %225, %226 : vector<8x64xf32>
    %228 = vector.extract_strided_slice %215 {offsets = [0, 0], sizes = [8, 64], strides = [1, 1]} : vector<8x128xf32> to vector<8x64xf32>
    %229 = vector.extract_strided_slice %219 {offsets = [0, 0], sizes = [8, 64], strides = [1, 1]} : vector<8x128xf32> to vector<8x64xf32>
    %230 = arith.addf %228, %229 : vector<8x64xf32>
    %231 = arith.negf %230 : vector<8x64xf32>
    %232 = math.exp %231 : vector<8x64xf32>
    %cst_65 = arith.constant 1.000000e+00 : f32
    %233 = vector.broadcast %cst_65 : f32 to vector<8x64xf32>
    %234 = arith.addf %233, %232 : vector<8x64xf32>
    %235 = arith.divf %233, %234 : vector<8x64xf32>
    %236 = vector.extract_strided_slice %213 {offsets = [0, 64], sizes = [8, 32], strides = [1, 1]} : vector<8x128xf32> to vector<8x32xf32>
    %237 = vector.extract_strided_slice %227 {offsets = [0, 0], sizes = [8, 32], strides = [1, 1]} : vector<8x64xf32> to vector<8x32xf32>
    %238 = vector.extract_strided_slice %218 {offsets = [0, 64], sizes = [8, 32], strides = [1, 1]} : vector<8x128xf32> to vector<8x32xf32>
    %239 = arith.addf %238, %20 : vector<8x32xf32>
    %240 = arith.mulf %237, %239 : vector<8x32xf32>
    %241 = arith.addf %236, %240 : vector<8x32xf32>
    %242 = math.tanh %241 : vector<8x32xf32>
    %243 = vector.extract_strided_slice %215 {offsets = [0, 64], sizes = [8, 32], strides = [1, 1]} : vector<8x128xf32> to vector<8x32xf32>
    %244 = vector.extract_strided_slice %235 {offsets = [0, 0], sizes = [8, 32], strides = [1, 1]} : vector<8x64xf32> to vector<8x32xf32>
    %245 = vector.extract_strided_slice %219 {offsets = [0, 64], sizes = [8, 32], strides = [1, 1]} : vector<8x128xf32> to vector<8x32xf32>
    %246 = arith.addf %245, %23 : vector<8x32xf32>
    %247 = arith.mulf %244, %246 : vector<8x32xf32>
    %248 = arith.addf %243, %247 : vector<8x32xf32>
    %249 = math.tanh %248 : vector<8x32xf32>
    %250 = vector.extract_strided_slice %227 {offsets = [0, 32], sizes = [8, 32], strides = [1, 1]} : vector<8x64xf32> to vector<8x32xf32>
    %251 = vector.extract_strided_slice %235 {offsets = [0, 32], sizes = [8, 32], strides = [1, 1]} : vector<8x64xf32> to vector<8x32xf32>
    %cst_66 = arith.constant 1.000000e+00 : f32
    %252 = vector.broadcast %cst_66 : f32 to vector<8x32xf32>
    %253 = arith.subf %252, %250 : vector<8x32xf32>
    %254 = arith.mulf %253, %242 : vector<8x32xf32>
    %255 = vector.extract_strided_slice %204 {offsets = [0, 0], sizes = [8, 32], strides = [1, 1]} : vector<8x64xf32> to vector<8x32xf32>
    %256 = arith.mulf %250, %255 : vector<8x32xf32>
    %257 = arith.addf %254, %256 : vector<8x32xf32>
    %cst_67 = arith.constant 1.000000e+00 : f32
    %258 = vector.broadcast %cst_67 : f32 to vector<8x32xf32>
    %259 = arith.subf %258, %251 : vector<8x32xf32>
    %260 = arith.mulf %259, %249 : vector<8x32xf32>
    %261 = vector.extract_strided_slice %204 {offsets = [0, 32], sizes = [8, 32], strides = [1, 1]} : vector<8x64xf32> to vector<8x32xf32>
    %262 = arith.mulf %251, %261 : vector<8x32xf32>
    %263 = arith.addf %260, %262 : vector<8x32xf32>
    %264 = tpu.concatenate %257, %263 in 1 : vector<8x32xf32>, vector<8x32xf32> -> vector<8x64xf32>
    %265 = arith.addf %205, %264 : vector<8x64xf32>
    %266 = arith.maximumf %206, %264 : vector<8x64xf32>
    %c4_i32 = arith.constant 4 : i32
    %c0_68 = arith.constant 0 : index
    %c0_69 = arith.constant 0 : index
    %267 = vector.load %arg16[%c0_68, %c0_69] : memref<8x64xf32, #tpu.memory_space<vmem>>, vector<8x64xf32>
    tpu.vector_store %arg16[%c0_68, %c0_69], %264 {strides = array<i32>} : memref<8x64xf32, #tpu.memory_space<vmem>>, vector<8x64xf32>,
    %c0_70 = arith.constant 0 : index
    %c0_71 = arith.constant 0 : index
    %268 = vector.load %arg17[%c0_70, %c0_71] : memref<8x64xf32, #tpu.memory_space<vmem>>, vector<8x64xf32>
    tpu.vector_store %arg17[%c0_70, %c0_71], %265 {strides = array<i32>} : memref<8x64xf32, #tpu.memory_space<vmem>>, vector<8x64xf32>,
    %c0_72 = arith.constant 0 : index
    %c0_73 = arith.constant 0 : index
    %269 = vector.load %arg18[%c0_72, %c0_73] : memref<8x64xf32, #tpu.memory_space<vmem>>, vector<8x64xf32>
    tpu.vector_store %arg18[%c0_72, %c0_73], %266 {strides = array<i32>} : memref<8x64xf32, #tpu.memory_space<vmem>>, vector<8x64xf32>,
    %c1_i32_74 = arith.constant 1 : i32
    %270 = arith.cmpi eq, %arg0, %c1_i32_74 : i32
    %271 = arith.extui %270 : i1 to i32
    %c0_i32_75 = arith.constant 0 : i32
    %272 = arith.cmpi ne, %271, %c0_i32_75 : i32
    scf.if %272 {
      %c0_76 = arith.constant 0 : index
      %c0_77 = arith.constant 0 : index
      %273 = vector.load %arg17[%c0_76, %c0_77] : memref<8x64xf32, #tpu.memory_space<vmem>>, vector<8x64xf32>
      %cst_78 = arith.constant 1.250000e-01 : f32
      %274 = vector.broadcast %cst_78 : f32 to vector<8x64xf32>
      %275 = arith.mulf %273, %274 : vector<8x64xf32>
      %276 = arith.truncf %275 : vector<8x64xf32> to vector<8x64xbf16>
      %c0_79 = arith.constant 0 : index
      %c0_80 = arith.constant 0 : index
      %277 = vector.load %arg9[%c0_79, %c0_80] : memref<64x32xbf16, #tpu.memory_space<vmem>>, vector<64x32xbf16>
      %cst_81 = arith.constant dense<0.000000e+00> : vector<8x32xf32>
      %278 = tpu.matmul %276, %277, %cst_81 {dimension_numbers = #tpu.dot_dimension_numbers<[1], [0], [0], [1], [0, 0, 1, 1], [], []>} : vector<8x64xbf16>, vector<64x32xbf16>, vector<8x32xf32> -> vector<8x32xf32>
      %c0_82 = arith.constant 0 : index
      %c0_83 = arith.constant 0 : index
      %279 = vector.load %arg18[%c0_82, %c0_83] : memref<8x64xf32, #tpu.memory_space<vmem>>, vector<8x64xf32>
      %280 = arith.truncf %279 : vector<8x64xf32> to vector<8x64xbf16>
      %c0_84 = arith.constant 0 : index
      %c0_85 = arith.constant 0 : index
      %281 = vector.load %arg10[%c0_84, %c0_85] : memref<64x32xbf16, #tpu.memory_space<vmem>>, vector<64x32xbf16>
      %cst_86 = arith.constant dense<0.000000e+00> : vector<8x32xf32>
      %282 = tpu.matmul %280, %281, %cst_86 {dimension_numbers = #tpu.dot_dimension_numbers<[1], [0], [0], [1], [0, 0, 1, 1], [], []>} : vector<8x64xbf16>, vector<64x32xbf16>, vector<8x32xf32> -> vector<8x32xf32>
      %283 = arith.addf %278, %282 : vector<8x32xf32>
      %c0_87 = arith.constant 0 : index
      %c0_88 = arith.constant 0 : index
      %284 = vector.load %arg11[%c0_87, %c0_88] : memref<1x32xf32, #tpu.memory_space<vmem>>, vector<1x32xf32>
      %285 = vector.broadcast %284 : vector<1x32xf32> to vector<8x32xf32>
      %286 = arith.addf %283, %285 : vector<8x32xf32>
      %287 = vector.extract_strided_slice %286 {offsets = [0, 0], sizes = [8, 16], strides = [1, 1]} : vector<8x32xf32> to vector<8x16xf32>
      %288 = vector.extract_strided_slice %286 {offsets = [0, 16], sizes = [8, 16], strides = [1, 1]} : vector<8x32xf32> to vector<8x16xf32>
      %c0_89 = arith.constant 0 : index
      %c0_90 = arith.constant 0 : index
      %289 = vector.load %arg12[%c0_89, %c0_90] : memref<8x16xf32, #tpu.memory_space<vmem>>, vector<8x16xf32>
      %cst_91 = arith.constant 5.000000e-01 : f32
      %290 = vector.broadcast %cst_91 : f32 to vector<8x16xf32>
      %291 = arith.mulf %290, %288 : vector<8x16xf32>
      %292 = math.exp %291 : vector<8x16xf32>
      %293 = arith.mulf %289, %292 : vector<8x16xf32>
      %294 = arith.addf %287, %293 : vector<8x16xf32>
      %c0_92 = arith.constant 0 : index
      %c0_93 = arith.constant 0 : index
      %295 = vector.load %arg13[%c0_92, %c0_93] : memref<8x48xf32, #tpu.memory_space<vmem>>, vector<8x32xf32>
      tpu.vector_store %arg13[%c0_92, %c0_93], %286 {strides = array<i32>} : memref<8x48xf32, #tpu.memory_space<vmem>>, vector<8x32xf32>,
      %c0_94 = arith.constant 0 : index
      %c32_95 = arith.constant 32 : index
      %296 = vector.load %arg13[%c0_94, %c32_95] : memref<8x48xf32, #tpu.memory_space<vmem>>, vector<8x16xf32>
      tpu.vector_store %arg13[%c0_94, %c32_95], %294 {strides = array<i32>} : memref<8x48xf32, #tpu.memory_space<vmem>>, vector<8x16xf32>,
    } else {
    }
    return
  }
  func.func @transform_0(%arg0: i32) -> (i32, i32) {
    %c0_i32 = arith.constant 0 : i32
    %c0_i32_0 = arith.constant 0 : i32
    return %arg0, %c0_i32 : i32, i32
  }
  func.func @transform_1(%arg0: i32) -> (i32, i32) {
    %c1_i32 = arith.constant 1 : i32
    %0 = arith.subi %c1_i32, %arg0 : i32
    %c0_i32 = arith.constant 0 : i32
    %c0_i32_0 = arith.constant 0 : i32
    return %0, %c0_i32 : i32, i32
  }
  func.func @transform_2(%arg0: i32) -> (i32, i32) {
    %c0_i32 = arith.constant 0 : i32
    %c0_i32_0 = arith.constant 0 : i32
    %c0_i32_1 = arith.constant 0 : i32
    return %c0_i32, %c0_i32_0 : i32, i32
  }
  func.func @transform_3(%arg0: i32) -> (i32, i32) {
    %c0_i32 = arith.constant 0 : i32
    %c0_i32_0 = arith.constant 0 : i32
    %c0_i32_1 = arith.constant 0 : i32
    return %c0_i32, %c0_i32_0 : i32, i32
  }
  func.func @transform_4(%arg0: i32) -> (i32, i32) {
    %c0_i32 = arith.constant 0 : i32
    %c0_i32_0 = arith.constant 0 : i32
    %c0_i32_1 = arith.constant 0 : i32
    return %c0_i32, %c0_i32_0 : i32, i32
  }
  func.func @transform_5(%arg0: i32) -> (i32, i32) {
    %c0_i32 = arith.constant 0 : i32
    %c0_i32_0 = arith.constant 0 : i32
    %c0_i32_1 = arith.constant 0 : i32
    return %c0_i32, %c0_i32_0 : i32, i32
  }
  func.func @transform_6(%arg0: i32) -> (i32, i32) {
    %c0_i32 = arith.constant 0 : i32
    %c0_i32_0 = arith.constant 0 : i32
    %c0_i32_1 = arith.constant 0 : i32
    return %c0_i32, %c0_i32_0 : i32, i32
  }
  func.func @transform_7(%arg0: i32) -> (i32, i32) {
    %c0_i32 = arith.constant 0 : i32
    %c0_i32_0 = arith.constant 0 : i32
    %c0_i32_1 = arith.constant 0 : i32
    return %c0_i32, %c0_i32_0 : i32, i32
  }
  func.func @transform_8(%arg0: i32) -> (i32, i32) {
    %c0_i32 = arith.constant 0 : i32
    %c0_i32_0 = arith.constant 0 : i32
    %c0_i32_1 = arith.constant 0 : i32
    return %c0_i32, %c0_i32_0 : i32, i32
  }
  func.func @transform_9(%arg0: i32) -> (i32, i32) {
    %c0_i32 = arith.constant 0 : i32
    %c0_i32_0 = arith.constant 0 : i32
    %c0_i32_1 = arith.constant 0 : i32
    return %c0_i32, %c0_i32_0 : i32, i32
  }
  func.func @transform_10(%arg0: i32) -> (i32, i32) {
    %c0_i32 = arith.constant 0 : i32
    %c0_i32_0 = arith.constant 0 : i32
    %c0_i32_1 = arith.constant 0 : i32
    return %c0_i32, %c0_i32_0 : i32, i32
  }
  func.func @transform_11(%arg0: i32) -> (i32, i32) {
    %c0_i32 = arith.constant 0 : i32
    %c0_i32_0 = arith.constant 0 : i32
    %c0_i32_1 = arith.constant 0 : i32
    return %c0_i32, %c0_i32_0 : i32, i32
  }
  func.func @transform_12(%arg0: i32) -> (i32, i32) {
    %c0_i32 = arith.constant 0 : i32
    %c0_i32_0 = arith.constant 0 : i32
    %c0_i32_1 = arith.constant 0 : i32
    return %c0_i32, %c0_i32_0 : i32, i32
  }
}

</mosaic_0001>

<llo_original>
// kernel: tpu_custom_call.1
$region0: #{tpu_custom_call.1}
  #allocation0 [shape = 'u32[]', space=smem, size = 0x4, offset = 0x4, fixed_abs, tag = 'smem constant byte address 0x4 - core index']
  #allocation1 [shape = 'u32[144,128]{1,0:T(1,128)}', space=vmem, size = 0x12000, scoped, tag = 'internal scratch']
  #allocation2 [shape = 'f32[32,128]{1,0:T(8,128)}', space=vmem, size = 0x4000, scoped, tag = 'scratch operand']
  #allocation3 [shape = 'f32[32,128]{1,0:T(8,128)}', space=vmem, size = 0x4000, scoped, tag = 'scratch operand']
  #allocation4 [shape = 'f32[8,64]{1,0:T(8,128)}', space=vmem, size = 0x1000, scoped, tag = 'scratch operand']
  #allocation5 [shape = 'f32[8,64]{1,0:T(8,128)}', space=vmem, size = 0x1000, scoped, tag = 'scratch operand']
  #allocation6 [shape = 'f32[8,64]{1,0:T(8,128)}', space=vmem, size = 0x1000, scoped, tag = 'scratch operand']
  %s0 = inlined_call_operand.vmem [shape: bf16[64,32], index: 0, kind: input, shape index: {}]
  %s1 = inlined_call_operand.vmem [shape: bf16[64,32], index: 1, kind: input, shape index: {}]
  %s2 = inlined_call_operand.vmem [shape: bf16[32,128], index: 2, kind: input, shape index: {}]
  %s3 = inlined_call_operand.vmem [shape: bf16[32,128], index: 3, kind: input, shape index: {}]
  %s4 = inlined_call_operand.vmem [shape: f32[1,128], index: 4, kind: input, shape index: {}]
  %s5 = inlined_call_operand.vmem [shape: f32[1,128], index: 5, kind: input, shape index: {}]
  %s6 = inlined_call_operand.vmem [shape: bf16[64,256], index: 6, kind: input, shape index: {}]
  %s7 = inlined_call_operand.vmem [shape: f32[1,64], index: 7, kind: input, shape index: {}]
  %s8 = inlined_call_operand.vmem [shape: bf16[64,32], index: 8, kind: input, shape index: {}]
  %s9 = inlined_call_operand.vmem [shape: bf16[64,32], index: 9, kind: input, shape index: {}]
  %s10 = inlined_call_operand.vmem [shape: f32[1,32], index: 10, kind: input, shape index: {}]
  %s11 = inlined_call_operand.vmem [shape: f32[8,16], index: 11, kind: input, shape index: {}]
  %s12 = inlined_call_operand.hbm [shape: f32[8,48], index: 12, kind: output, shape index: {}]
  %s13 = sld [smem:[#allocation0]]
  $region89: #{tpu_custom_call.1} parent=0
    _
  %s15 = ssub.s32 1, %s13
  %s16 = scalar_select 0, %s15, %s13
  $region1: #{tpu_custom_call.1} parent=0
    #allocation7 [shape = 'u8[4096]{0}', space=vmem, size = 0x1000, scoped, tag = 'output window, operand 0, single buffered']
    #allocation8 [shape = 's32[2]{0}', space=sflag, size = 0x8, scoped, tag = 'scoped memory for tpu_custom_call.1']
    %17 = vsyncpa [#allocation8], 0
    loop: start=0, step=1, limit=4
    $region2: #{tpu_custom_call.1} parent=1 // loop_pre_header
      _
    $region3: #{tpu_custom_call.1} parent=1 // loop_header
      %s19 = sphi 0, %s23
      %p20 = scmp.ge.s32.totalorder %s19, 4
      %s29 = sphi 0, %s31
      %s32 = sphi 0, %s29
      %s33 = sphi 0, %s32
      %s49 = sphi 0, %s33
      %s57 = sphi 0, %s59
      %s60 = sphi 0, %s57
      %s61 = sphi 0, %s60
      %s77 = sphi 0, %s61
      %s81 = sphi 0, %s81
      %s83 = sphi 0, %s81
      %s84 = sphi 0, %s83
      %s98 = sphi 0, %s84
      %s102 = sphi 0, %s102
      %s104 = sphi 0, %s102
      %s105 = sphi 0, %s104
      %s119 = sphi 0, %s105
      %s123 = sphi 0, %s123
      %s125 = sphi 0, %s123
      %s126 = sphi 0, %s125
      %s140 = sphi 0, %s126
      %s144 = sphi 0, %s144
      %s146 = sphi 0, %s144
      %s147 = sphi 0, %s146
      %s161 = sphi 0, %s147
      %s165 = sphi 0, %s165
      %s167 = sphi 0, %s165
      %s168 = sphi 0, %s167
      %s182 = sphi 0, %s168
      %s186 = sphi 0, %s186
      %s188 = sphi 0, %s186
      %s189 = sphi 0, %s188
      %s203 = sphi 0, %s189
      %s207 = sphi 0, %s207
      %s209 = sphi 0, %s207
      %s210 = sphi 0, %s209
      %s224 = sphi 0, %s210
      %s228 = sphi 0, %s228
      %s230 = sphi 0, %s228
      %s231 = sphi 0, %s230
      %s245 = sphi 0, %s231
      %s249 = sphi 0, %s249
      %s251 = sphi 0, %s249
      %s252 = sphi 0, %s251
      %s266 = sphi 0, %s252
      %s270 = sphi 0, %s270
      %s272 = sphi 0, %s270
      %s273 = sphi 0, %s272
      %s287 = sphi 0, %s273
      %s291 = sphi 0, %s291
      %s293 = sphi 0, %s291
      %s294 = sphi 0, %s293
      %s308 = sphi 0, %s294
    $region4: #{tpu_custom_call.1} parent=1 // loop_header_branch
      %22 = sbr.rel (%p20) target = $region8
    $region5: #{tpu_custom_call.1} parent=1 // loop_body
      %s24 = ssub.s32 %s19, 1
      %s25 = ssub.s32 %s19, 2
      %s26 = sadd.s32 %s19, 1
      %s27 = ssub.s32 %s19, %s26
      %p28 = scmp.eq.s32.totalorder %s27, 0
      %s30 = sadd.s32 %s29, 1
      %s31 = scalar_select %p28, %s29, %s30
      %p34 = pneg %p28
      %p35 = scmp.eq.s32.totalorder %s19, 1
      %p36 = por %p34, %p35
      %p37 = scmp.ne.s32.totalorder %s29, %s32
      %p38 = scmp.eq.s32.totalorder %s19, 0
      %p39 = por %p37, %p38
      %p40 = scmp.ne.s32.totalorder %s29, %s32
      %p41 = scmp.eq.s32.totalorder %s24, 1
      %p42 = por %p40, %p41
      %p43 = scmp.ne.s32.totalorder %s32, %s33
      %p44 = scmp.eq.s32.totalorder %s24, 0
      %p45 = por %p43, %p44
      %p46 = scmp.ne.s32.totalorder %s32, %s33
      %p47 = scmp.eq.s32.totalorder %s25, 1
      %p48 = por %p46, %p47
      %p50 = scmp.ne.s32.totalorder %s33, %s49
      %p51 = scmp.eq.s32.totalorder %s25, 0
      %p52 = por %p50, %p51
      %s53 = ssub.s32 1, %s19
      %s54 = ssub.s32 1, %s26
      %s55 = ssub.s32 %s53, %s54
      %p56 = scmp.eq.s32.totalorder %s55, 0
      %s58 = sadd.s32 %s57, 1
      %s59 = scalar_select %p56, %s57, %s58
      %p62 = pneg %p56
      %p63 = scmp.eq.s32.totalorder %s19, 1
      %p64 = por %p62, %p63
      %p65 = scmp.ne.s32.totalorder %s57, %s60
      %p66 = scmp.eq.s32.totalorder %s19, 0
      %p67 = por %p65, %p66
      %p68 = scmp.ne.s32.totalorder %s57, %s60
      %p69 = scmp.eq.s32.totalorder %s24, 1
      %p70 = por %p68, %p69
      %p71 = scmp.ne.s32.totalorder %s60, %s61
      %p72 = scmp.eq.s32.totalorder %s24, 0
      %p73 = por %p71, %p72
      %p74 = scmp.ne.s32.totalorder %s60, %s61
      %p75 = scmp.eq.s32.totalorder %s25, 1
      %p76 = por %p74, %p75
      %p78 = scmp.ne.s32.totalorder %s61, %s77
      %p79 = scmp.eq.s32.totalorder %s25, 0
      %p80 = por %p78, %p79
      %s82 = sadd.s32 %s81, 1
      %p85 = scmp.eq.s32.totalorder %s19, 1
      %p86 = scmp.ne.s32.totalorder %s81, %s83
      %p87 = scmp.eq.s32.totalorder %s19, 0
      %p88 = por %p86, %p87
      %p89 = scmp.ne.s32.totalorder %s81, %s83
      %p90 = scmp.eq.s32.totalorder %s24, 1
      %p91 = por %p89, %p90
      %p92 = scmp.ne.s32.totalorder %s83, %s84
      %p93 = scmp.eq.s32.totalorder %s24, 0
      %p94 = por %p92, %p93
      %p95 = scmp.ne.s32.totalorder %s83, %s84
      %p96 = scmp.eq.s32.totalorder %s25, 1
      %p97 = por %p95, %p96
      %p99 = scmp.ne.s32.totalorder %s84, %s98
      %p100 = scmp.eq.s32.totalorder %s25, 0
      %p101 = por %p99, %p100
      %s103 = sadd.s32 %s102, 1
      %p106 = scmp.eq.s32.totalorder %s19, 1
      %p107 = scmp.ne.s32.totalorder %s102, %s104
      %p108 = scmp.eq.s32.totalorder %s19, 0
      %p109 = por %p107, %p108
      %p110 = scmp.ne.s32.totalorder %s102, %s104
      %p111 = scmp.eq.s32.totalorder %s24, 1
      %p112 = por %p110, %p111
      %p113 = scmp.ne.s32.totalorder %s104, %s105
      %p114 = scmp.eq.s32.totalorder %s24, 0
      %p115 = por %p113, %p114
      %p116 = scmp.ne.s32.totalorder %s104, %s105
      %p117 = scmp.eq.s32.totalorder %s25, 1
      %p118 = por %p116, %p117
      %p120 = scmp.ne.s32.totalorder %s105, %s119
      %p121 = scmp.eq.s32.totalorder %s25, 0
      %p122 = por %p120, %p121
      %s124 = sadd.s32 %s123, 1
      %p127 = scmp.eq.s32.totalorder %s19, 1
      %p128 = scmp.ne.s32.totalorder %s123, %s125
      %p129 = scmp.eq.s32.totalorder %s19, 0
      %p130 = por %p128, %p129
      %p131 = scmp.ne.s32.totalorder %s123, %s125
      %p132 = scmp.eq.s32.totalorder %s24, 1
      %p133 = por %p131, %p132
      %p134 = scmp.ne.s32.totalorder %s125, %s126
      %p135 = scmp.eq.s32.totalorder %s24, 0
      %p136 = por %p134, %p135
      %p137 = scmp.ne.s32.totalorder %s125, %s126
      %p138 = scmp.eq.s32.totalorder %s25, 1
      %p139 = por %p137, %p138
      %p141 = scmp.ne.s32.totalorder %s126, %s140
      %p142 = scmp.eq.s32.totalorder %s25, 0
      %p143 = por %p141, %p142
      %s145 = sadd.s32 %s144, 1
      %p148 = scmp.eq.s32.totalorder %s19, 1
      %p149 = scmp.ne.s32.totalorder %s144, %s146
      %p150 = scmp.eq.s32.totalorder %s19, 0
      %p151 = por %p149, %p150
      %p152 = scmp.ne.s32.totalorder %s144, %s146
      %p153 = scmp.eq.s32.totalorder %s24, 1
      %p154 = por %p152, %p153
      %p155 = scmp.ne.s32.totalorder %s146, %s147
      %p156 = scmp.eq.s32.totalorder %s24, 0
      %p157 = por %p155, %p156
      %p158 = scmp.ne.s32.totalorder %s146, %s147
      %p159 = scmp.eq.s32.totalorder %s25, 1
      %p160 = por %p158, %p159
      %p162 = scmp.ne.s32.totalorder %s147, %s161
      %p163 = scmp.eq.s32.totalorder %s25, 0
      %p164 = por %p162, %p163
      %s166 = sadd.s32 %s165, 1
      %p169 = scmp.eq.s32.totalorder %s19, 1
      %p170 = scmp.ne.s32.totalorder %s165, %s167
      %p171 = scmp.eq.s32.totalorder %s19, 0
      %p172 = por %p170, %p171
      %p173 = scmp.ne.s32.totalorder %s165, %s167
      %p174 = scmp.eq.s32.totalorder %s24, 1
      %p175 = por %p173, %p174
      %p176 = scmp.ne.s32.totalorder %s167, %s168
      %p177 = scmp.eq.s32.totalorder %s24, 0
      %p178 = por %p176, %p177
      %p179 = scmp.ne.s32.totalorder %s167, %s168
      %p180 = scmp.eq.s32.totalorder %s25, 1
      %p181 = por %p179, %p180
      %p183 = scmp.ne.s32.totalorder %s168, %s182
      %p184 = scmp.eq.s32.totalorder %s25, 0
      %p185 = por %p183, %p184
      %s187 = sadd.s32 %s186, 1
      %p190 = scmp.eq.s32.totalorder %s19, 1
      %p191 = scmp.ne.s32.totalorder %s186, %s188
      %p192 = scmp.eq.s32.totalorder %s19, 0
      %p193 = por %p191, %p192
      %p194 = scmp.ne.s32.totalorder %s186, %s188
      %p195 = scmp.eq.s32.totalorder %s24, 1
      %p196 = por %p194, %p195
      %p197 = scmp.ne.s32.totalorder %s188, %s189
      %p198 = scmp.eq.s32.totalorder %s24, 0
      %p199 = por %p197, %p198
      %p200 = scmp.ne.s32.totalorder %s188, %s189
      %p201 = scmp.eq.s32.totalorder %s25, 1
      %p202 = por %p200, %p201
      %p204 = scmp.ne.s32.totalorder %s189, %s203
      %p205 = scmp.eq.s32.totalorder %s25, 0
      %p206 = por %p204, %p205
      %s208 = sadd.s32 %s207, 1
      %p211 = scmp.eq.s32.totalorder %s19, 1
      %p212 = scmp.ne.s32.totalorder %s207, %s209
      %p213 = scmp.eq.s32.totalorder %s19, 0
      %p214 = por %p212, %p213
      %p215 = scmp.ne.s32.totalorder %s207, %s209
      %p216 = scmp.eq.s32.totalorder %s24, 1
      %p217 = por %p215, %p216
      %p218 = scmp.ne.s32.totalorder %s209, %s210
      %p219 = scmp.eq.s32.totalorder %s24, 0
      %p220 = por %p218, %p219
      %p221 = scmp.ne.s32.totalorder %s209, %s210
      %p222 = scmp.eq.s32.totalorder %s25, 1
      %p223 = por %p221, %p222
      %p225 = scmp.ne.s32.totalorder %s210, %s224
      %p226 = scmp.eq.s32.totalorder %s25, 0
      %p227 = por %p225, %p226
      %s229 = sadd.s32 %s228, 1
      %p232 = scmp.eq.s32.totalorder %s19, 1
      %p233 = scmp.ne.s32.totalorder %s228, %s230
      %p234 = scmp.eq.s32.totalorder %s19, 0
      %p235 = por %p233, %p234
      %p236 = scmp.ne.s32.totalorder %s228, %s230
      %p237 = scmp.eq.s32.totalorder %s24, 1
      %p238 = por %p236, %p237
      %p239 = scmp.ne.s32.totalorder %s230, %s231
      %p240 = scmp.eq.s32.totalorder %s24, 0
      %p241 = por %p239, %p240
      %p242 = scmp.ne.s32.totalorder %s230, %s231
      %p243 = scmp.eq.s32.totalorder %s25, 1
      %p244 = por %p242, %p243
      %p246 = scmp.ne.s32.totalorder %s231, %s245
      %p247 = scmp.eq.s32.totalorder %s25, 0
      %p248 = por %p246, %p247
      %s250 = sadd.s32 %s249, 1
      %p253 = scmp.eq.s32.totalorder %s19, 1
      %p254 = scmp.ne.s32.totalorder %s249, %s251
      %p255 = scmp.eq.s32.totalorder %s19, 0
      %p256 = por %p254, %p255
      %p257 = scmp.ne.s32.totalorder %s249, %s251
      %p258 = scmp.eq.s32.totalorder %s24, 1
      %p259 = por %p257, %p258
      %p260 = scmp.ne.s32.totalorder %s251, %s252
      %p261 = scmp.eq.s32.totalorder %s24, 0
      %p262 = por %p260, %p261
      %p263 = scmp.ne.s32.totalorder %s251, %s252
      %p264 = scmp.eq.s32.totalorder %s25, 1
      %p265 = por %p263, %p264
      %p267 = scmp.ne.s32.totalorder %s252, %s266
      %p268 = scmp.eq.s32.totalorder %s25, 0
      %p269 = por %p267, %p268
      %s271 = sadd.s32 %s270, 1
      %p274 = scmp.eq.s32.totalorder %s19, 1
      %p275 = scmp.ne.s32.totalorder %s270, %s272
      %p276 = scmp.eq.s32.totalorder %s19, 0
      %p277 = por %p275, %p276
      %p278 = scmp.ne.s32.totalorder %s270, %s272
      %p279 = scmp.eq.s32.totalorder %s24, 1
      %p280 = por %p278, %p279
      %p281 = scmp.ne.s32.totalorder %s272, %s273
      %p282 = scmp.eq.s32.totalorder %s24, 0
      %p283 = por %p281, %p282
      %p284 = scmp.ne.s32.totalorder %s272, %s273
      %p285 = scmp.eq.s32.totalorder %s25, 1
      %p286 = por %p284, %p285
      %p288 = scmp.ne.s32.totalorder %s273, %s287
      %p289 = scmp.eq.s32.totalorder %s25, 0
      %p290 = por %p288, %p289
      %s292 = sadd.s32 %s291, 1
      %p295 = scmp.eq.s32.totalorder %s19, 1
      %p296 = scmp.ne.s32.totalorder %s291, %s293
      %p297 = scmp.eq.s32.totalorder %s19, 0
      %p298 = por %p296, %p297
      %p299 = scmp.ne.s32.totalorder %s291, %s293
      %p300 = scmp.eq.s32.totalorder %s24, 1
      %p301 = por %p299, %p300
      %p302 = scmp.ne.s32.totalorder %s293, %s294
      %p303 = scmp.eq.s32.totalorder %s24, 0
      %p304 = por %p302, %p303
      %p305 = scmp.ne.s32.totalorder %s293, %s294
      %p306 = scmp.eq.s32.totalorder %s25, 1
      %p307 = por %p305, %p306
      %p309 = scmp.ne.s32.totalorder %s294, %s308
      %p310 = scmp.eq.s32.totalorder %s25, 0
      %p311 = por %p309, %p310
      %p312 = scmp.le.s32.totalorder 1, %s19
      %p313 = scmp.lt.s32.totalorder %s19, 3
      %p314 = pnand %p312, %p313
      %p315 = pneg %p314
      // Predicated region
      $region9: #{tpu_custom_call.1} parent=5 // pred_check
        _
      $region10: #{tpu_custom_call.1} parent=5 // pred_check_branch
        %317 = sbr.rel (%p314) target = $region12
      $region11: #{tpu_custom_call.1} parent=5 // pred_region
        %s318 = ssub.s32 %s19, 1
        // Predicated region
        $region13: #{tpu_custom_call.1} parent=11 // pred_check
          %p319 = pneg %p94
        $region14: #{tpu_custom_call.1} parent=11 // pred_check_branch
          %321 = sbr.rel (%p319) target = $region16
        $region15: #{tpu_custom_call.1} parent=11 // pred_region
          _
        $region16: #{tpu_custom_call.1} parent=11 // pred_fallthru
          _
        // Predicated region
        $region17: #{tpu_custom_call.1} parent=11 // pred_check
          %p322 = pneg %p115
        $region18: #{tpu_custom_call.1} parent=11 // pred_check_branch
          %324 = sbr.rel (%p322) target = $region20
        $region19: #{tpu_custom_call.1} parent=11 // pred_region
          _
        $region20: #{tpu_custom_call.1} parent=11 // pred_fallthru
          _
        // Predicated region
        $region21: #{tpu_custom_call.1} parent=11 // pred_check
          %p325 = pneg %p136
        $region22: #{tpu_custom_call.1} parent=11 // pred_check_branch
          %327 = sbr.rel (%p325) target = $region24
        $region23: #{tpu_custom_call.1} parent=11 // pred_region
          _
        $region24: #{tpu_custom_call.1} parent=11 // pred_fallthru
          _
        // Predicated region
        $region25: #{tpu_custom_call.1} parent=11 // pred_check
          %p328 = pneg %p157
        $region26: #{tpu_custom_call.1} parent=11 // pred_check_branch
          %330 = sbr.rel (%p328) target = $region28
        $region27: #{tpu_custom_call.1} parent=11 // pred_region
          _
        $region28: #{tpu_custom_call.1} parent=11 // pred_fallthru
          _
        // Predicated region
        $region29: #{tpu_custom_call.1} parent=11 // pred_check
          %p331 = pneg %p178
        $region30: #{tpu_custom_call.1} parent=11 // pred_check_branch
          %333 = sbr.rel (%p331) target = $region32
        $region31: #{tpu_custom_call.1} parent=11 // pred_region
          _
        $region32: #{tpu_custom_call.1} parent=11 // pred_fallthru
          _
        // Predicated region
        $region33: #{tpu_custom_call.1} parent=11 // pred_check
          %p334 = pneg %p199
        $region34: #{tpu_custom_call.1} parent=11 // pred_check_branch
          %336 = sbr.rel (%p334) target = $region36
        $region35: #{tpu_custom_call.1} parent=11 // pred_region
          _
        $region36: #{tpu_custom_call.1} parent=11 // pred_fallthru
          _
        // Predicated region
        $region37: #{tpu_custom_call.1} parent=11 // pred_check
          %p337 = pneg %p220
        $region38: #{tpu_custom_call.1} parent=11 // pred_check_branch
          %339 = sbr.rel (%p337) target = $region40
        $region39: #{tpu_custom_call.1} parent=11 // pred_region
          _
        $region40: #{tpu_custom_call.1} parent=11 // pred_fallthru
          _
        // Predicated region
        $region41: #{tpu_custom_call.1} parent=11 // pred_check
          %p340 = pneg %p241
        $region42: #{tpu_custom_call.1} parent=11 // pred_check_branch
          %342 = sbr.rel (%p340) target = $region44
        $region43: #{tpu_custom_call.1} parent=11 // pred_region
          _
        $region44: #{tpu_custom_call.1} parent=11 // pred_fallthru
          _
        // Predicated region
        $region45: #{tpu_custom_call.1} parent=11 // pred_check
          %p343 = pneg %p262
        $region46: #{tpu_custom_call.1} parent=11 // pred_check_branch
          %345 = sbr.rel (%p343) target = $region48
        $region47: #{tpu_custom_call.1} parent=11 // pred_region
          _
        $region48: #{tpu_custom_call.1} parent=11 // pred_fallthru
          _
        // Predicated region
        $region49: #{tpu_custom_call.1} parent=11 // pred_check
          %p346 = pneg %p283
        $region50: #{tpu_custom_call.1} parent=11 // pred_check_branch
          %348 = sbr.rel (%p346) target = $region52
        $region51: #{tpu_custom_call.1} parent=11 // pred_region
          _
        $region52: #{tpu_custom_call.1} parent=11 // pred_fallthru
          _
      $region12: #{tpu_custom_call.1} parent=5 // pred_fallthru
        _
      %p349 = scmp.lt.s32.totalorder %s19, 2
      // Predicated region
      $region53: #{tpu_custom_call.1} parent=5 // pred_check
        %p350 = pneg %p349
      $region54: #{tpu_custom_call.1} parent=5 // pred_check_branch
        %352 = sbr.rel (%p350) target = $region56
      $region55: #{tpu_custom_call.1} parent=5 // pred_region
        // Predicated region
        $region57: #{tpu_custom_call.1} parent=55 // pred_check
          %p353 = pneg %p39
        $region58: #{tpu_custom_call.1} parent=55 // pred_check_branch
          %355 = sbr.rel (%p353) target = $region60
        $region59: #{tpu_custom_call.1} parent=55 // pred_region
          %s356 = smul.u32 4, %s19
          %p357 = scmp.lt.s32.totalorder %s356, 7
          %s358 = scalar_select %p357, %s356, 7
          %s359 = smul.addr %s358, 4
          %s360 = scalar_lea.vmem %s0, %s359
          %s361 = smul.u32 4, %s19
        $region60: #{tpu_custom_call.1} parent=55 // pred_fallthru
          _
        // Predicated region
        $region61: #{tpu_custom_call.1} parent=55 // pred_check
          %p362 = pneg %p67
        $region62: #{tpu_custom_call.1} parent=55 // pred_check_branch
          %364 = sbr.rel (%p362) target = $region64
        $region63: #{tpu_custom_call.1} parent=55 // pred_region
          %s365 = ssub.s32 1, %s19
          %s366 = smul.u32 4, %s365
          %p367 = scmp.lt.s32.totalorder %s366, 7
          %s368 = scalar_select %p367, %s366, 7
          %s369 = smul.addr %s368, 4
          %s370 = scalar_lea.vmem %s1, %s369
          %s371 = ssub.s32 1, %s19
          %s372 = smul.u32 4, %s371
        $region64: #{tpu_custom_call.1} parent=55 // pred_fallthru
          _
      $region56: #{tpu_custom_call.1} parent=5 // pred_fallthru
        _
      %p373 = scmp.le.s32.totalorder 1, %s19
      %p374 = scmp.lt.s32.totalorder %s19, 3
      %p375 = pnand %p373, %p374
      %p376 = pneg %p375
      // Predicated region
      $region65: #{tpu_custom_call.1} parent=5 // pred_check
        _
      $region66: #{tpu_custom_call.1} parent=5 // pred_check_branch
        %378 = sbr.rel (%p375) target = $region68
      $region67: #{tpu_custom_call.1} parent=5 // pred_region
        %s379 = ssub.s32 %s19, 1
        %s380 = smul.u32 4, %s24
        %p381 = scmp.lt.s32.totalorder %s380, 7
        %s382 = scalar_select %p381, %s380, 7
        %s383 = smul.addr %s382, 4
        %s384 = scalar_lea.vmem %s0, %s383
        %p385 = pneg %p45
        %p386 = pneg %p42
        %s387 = ssub.s32 1, %s24
        %s388 = smul.u32 4, %s387
        %p389 = scmp.lt.s32.totalorder %s388, 7
        %s390 = scalar_select %p389, %s388, 7
        %s391 = smul.addr %s390, 4
        %s392 = scalar_lea.vmem %s1, %s391
        %p393 = pneg %p73
        %p394 = pneg %p70
        %p395 = pneg %p94
        %p396 = pneg %p91
        %p397 = pneg %p115
        %p398 = pneg %p112
        %p399 = pneg %p136
        %p400 = pneg %p133
        %p401 = pneg %p157
        %p402 = pneg %p154
        %p403 = pneg %p178
        %p404 = pneg %p175
        %p405 = pneg %p199
        %p406 = pneg %p196
        %p407 = pneg %p220
        %p408 = pneg %p217
        %p409 = pneg %p241
        %p410 = pneg %p238
        %p411 = pneg %p262
        %p412 = pneg %p259
        %p413 = pneg %p283
        %p414 = pneg %p280
        %p415 = pneg %p304
        %p416 = pneg %p301
        %s417 = smul.u32 4, %s24
        %p418 = scmp.lt.s32.totalorder %s417, 7
        %s419 = scalar_select %p418, %s417, 7
        %s420 = smul.addr %s419, 4
        %s421 = scalar_lea.vmem %s0, %s420
        %s422 = smul.u32 4, %s24
        %s423 = ssub.s32 1, %s24
        %s424 = smul.u32 4, %s423
        %p425 = scmp.lt.s32.totalorder %s424, 7
        %s426 = scalar_select %p425, %s424, 7
        %s427 = smul.addr %s426, 4
        %s428 = scalar_lea.vmem %s1, %s427
        %s429 = ssub.s32 1, %s24
        %s430 = smul.u32 4, %s429
        %p432 = scmp.eq.s32.totalorder %s24, 0
        // Predicated region
        $region69: #{tpu_custom_call.1} parent=67 // pred_check
          %p433 = pneg %p432
        $region70: #{tpu_custom_call.1} parent=67 // pred_check_branch
          %435 = sbr.rel (%p433) target = $region72
        $region71: #{tpu_custom_call.1} parent=67 // pred_region
          %vm436 = vcmask 523264
          %437 = vst.msk [vmem:[#allocation4] sm:$0xff] %vm436, 0.0
          %438 = vst.msk [vmem:[#allocation5] sm:$0xff] %vm436, 0.0
          %439 = vst.msk [vmem:[#allocation6] sm:$0xff] %vm436, -inf
        $region72: #{tpu_custom_call.1} parent=67 // pred_fallthru
          _
        %v440 = vld [vmem:[%s421] sm:$0xf]
        %v441 = vld [vmem:[%s421 + $0x4] sm:$0xf]
        %v442 = vld [vmem:[%s421 + $0x8] sm:$0xf]
        %v443 = vld [vmem:[%s421 + $0xc] sm:$0xf]
        %v444 = vld [vmem:[%s2] sm:$0xf]
        %v445 = vld [vmem:[%s2 + $0x4] sm:$0xf]
        %v446 = vld [vmem:[%s2 + $0x8] sm:$0xf]
        %v447 = vld [vmem:[%s2 + $0xc] sm:$0xf]
        %v448 = vld [vmem:[%s4] sm:$0x1]
        %v450 = vlaneseq
        %v451 = vshrl.u32 %v450, 7
        %v452 = vsub.s32 0, %v451
        %v453 = vrot.slane %v448, %v452
        %v459 = vunpack.c.l.b16 %v440
        %v460 = vunpack.c.l.b16 %v441
        %v461 = vunpack.c.l.b16 %v442
        %v462 = vunpack.c.l.b16 %v443
        %v463 = vpack.c.b16 %v460, %v459
        %v464 = vpack.c.b16 %v462, %v461
        %v469 = vunpack.c.l.b16 %v444
        %v470 = vunpack.c.l.b16 %v445
        %v471 = vunpack.c.l.b16 %v446
        %v472 = vunpack.c.l.b16 %v447
        %v473 = vpack.c.b16 %v470, %v469
        %v474 = vpack.c.b16 %v472, %v471
        %vm477 = vcmask 261120
        %v479 = vsel %vm477, %v463, 0
        %v482 = vsel %vm477, %v464, 0
        %484 = vmatprep.subr.bf16.mxu0 0
        %485 = vmatpush1.bf16.msra.mxu0 %v473
        %486 = vmatprep.subr.bf16.mxu0 0
        %487 = vmatpush1.bf16.msra.mxu0 %v474
        %488 = vmatprep.subr.bf16.mxu0 0
        %489 = vmatpush1.bf16.msra.mxu0 0
        %490 = vmatprep.subr.bf16.mxu0 0
        %491 = vmatpush1.bf16.msra.mxu0 0
        %492 = vmatprep.subr.bf16.mxu0 0
        %493 = vmatpush1.bf16.msra.mxu0 0
        %494 = vmatprep.subr.bf16.mxu0 0
        %495 = vmatpush1.bf16.msra.mxu0 0
        %496 = vmatprep.subr.bf16.mxu0 0
        %497 = vmatpush1.bf16.msra.mxu0 0
        %498 = vmatprep.subr.bf16.mxu0 0
        %499 = vmatpush1.bf16.msra.mxu0 0
        %500 = vmatprep.subr.bf16.mxu0 0
        %501 = vmatpush1.bf16.msra.mxu0 0
        %502 = vmatprep.subr.bf16.mxu0 0
        %503 = vmatpush1.bf16.msra.mxu0 0
        %504 = vmatprep.subr.bf16.mxu0 0
        %505 = vmatpush1.bf16.msra.mxu0 0
        %506 = vmatprep.subr.bf16.mxu0 0
        %507 = vmatpush1.bf16.msra.mxu0 0
        %508 = vmatprep.subr.bf16.mxu0 0
        %509 = vmatpush1.bf16.msra.mxu0 0
        %510 = vmatprep.subr.bf16.mxu0 0
        %511 = vmatpush1.bf16.msra.mxu0 0
        %512 = vmatprep.subr.bf16.mxu0 0
        %513 = vmatpush1.bf16.msra.mxu0 0
        %514 = vmatprep.subr.bf16.mxu0 0
        %515 = vmatpush1.bf16.msra.mxu0 0
        %516 = vmatprep.mubr.bf16.mxu0 0
        %517 = vmatmul.mubr.bf16.gmra.mrb[0].mxu0 %v479
        %v518 = vpop.f32.mrb[0].mxu0
        %v519 = vadd.f32 %v453, %v518
        %v520 = vpop.f32.mrb[0].mxu0
        %v521 = vpop.f32.mrb[0].mxu0
        %v522 = vadd.f32 %v453, %v521
        %v523 = vpop.f32.mrb[0].mxu0
        %524 = vmatprep.mubr.bf16.mxu0 0
        %525 = vmatmul.mubr.bf16.gmra.mrb[0].mxu0 %v482
        %v526 = vpop.f32.mrb[0].mxu0
        %v527 = vadd.f32 %v453, %v526
        %v528 = vpop.f32.mrb[0].mxu0
        %v529 = vpop.f32.mrb[0].mxu0
        %v530 = vadd.f32 %v453, %v529
        %v531 = vpop.f32.mrb[0].mxu0
        %532 = vdwg.mxu0
        %533 = vst [vmem:[#allocation2] sm:$0xff] %v519
        %534 = vst [vmem:[#allocation2 + $0x8] sm:$0xff] %v522
        %535 = vst [vmem:[#allocation2 + $0x10] sm:$0xff] %v527
        %536 = vst [vmem:[#allocation2 + $0x18] sm:$0xff] %v530
        %v537 = vld [vmem:[%s428] sm:$0xf]
        %v538 = vld [vmem:[%s428 + $0x4] sm:$0xf]
        %v539 = vld [vmem:[%s428 + $0x8] sm:$0xf]
        %v540 = vld [vmem:[%s428 + $0xc] sm:$0xf]
        %v541 = vld [vmem:[%s3] sm:$0xf]
        %v542 = vld [vmem:[%s3 + $0x4] sm:$0xf]
        %v543 = vld [vmem:[%s3 + $0x8] sm:$0xf]
        %v544 = vld [vmem:[%s3 + $0xc] sm:$0xf]
        %v545 = vld [vmem:[%s5] sm:$0x1]
        %v547 = vlaneseq
        %v548 = vshrl.u32 %v547, 7
        %v549 = vsub.s32 0, %v548
        %v550 = vrot.slane %v545, %v549
        %v556 = vunpack.c.l.b16 %v537
        %v557 = vunpack.c.l.b16 %v538
        %v558 = vunpack.c.l.b16 %v539
        %v559 = vunpack.c.l.b16 %v540
        %v560 = vpack.c.b16 %v557, %v556
        %v561 = vpack.c.b16 %v559, %v558
        %v566 = vunpack.c.l.b16 %v541
        %v567 = vunpack.c.l.b16 %v542
        %v568 = vunpack.c.l.b16 %v543
        %v569 = vunpack.c.l.b16 %v544
        %v570 = vpack.c.b16 %v567, %v566
        %v571 = vpack.c.b16 %v569, %v568
        %v575 = vsel %vm477, %v560, 0
        %v578 = vsel %vm477, %v561, 0
        %580 = vmatprep.subr.bf16.mxu0 0
        %581 = vmatpush1.bf16.msra.mxu0 %v570
        %582 = vmatprep.subr.bf16.mxu0 0
        %583 = vmatpush1.bf16.msra.mxu0 %v571
        %584 = vmatprep.subr.bf16.mxu0 0
        %585 = vmatpush1.bf16.msra.mxu0 0
        %586 = vmatprep.subr.bf16.mxu0 0
        %587 = vmatpush1.bf16.msra.mxu0 0
        %588 = vmatprep.subr.bf16.mxu0 0
        %589 = vmatpush1.bf16.msra.mxu0 0
        %590 = vmatprep.subr.bf16.mxu0 0
        %591 = vmatpush1.bf16.msra.mxu0 0
        %592 = vmatprep.subr.bf16.mxu0 0
        %593 = vmatpush1.bf16.msra.mxu0 0
        %594 = vmatprep.subr.bf16.mxu0 0
        %595 = vmatpush1.bf16.msra.mxu0 0
        %596 = vmatprep.subr.bf16.mxu0 0
        %597 = vmatpush1.bf16.msra.mxu0 0
        %598 = vmatprep.subr.bf16.mxu0 0
        %599 = vmatpush1.bf16.msra.mxu0 0
        %600 = vmatprep.subr.bf16.mxu0 0
        %601 = vmatpush1.bf16.msra.mxu0 0
        %602 = vmatprep.subr.bf16.mxu0 0
        %603 = vmatpush1.bf16.msra.mxu0 0
        %604 = vmatprep.subr.bf16.mxu0 0
        %605 = vmatpush1.bf16.msra.mxu0 0
        %606 = vmatprep.subr.bf16.mxu0 0
        %607 = vmatpush1.bf16.msra.mxu0 0
        %608 = vmatprep.subr.bf16.mxu0 0
        %609 = vmatpush1.bf16.msra.mxu0 0
        %610 = vmatprep.subr.bf16.mxu0 0
        %611 = vmatpush1.bf16.msra.mxu0 0
        %612 = vmatprep.mubr.bf16.mxu0 0
        %613 = vmatmul.mubr.bf16.gmra.mrb[0].mxu0 %v575
        %v614 = vpop.f32.mrb[0].mxu0
        %v615 = vadd.f32 %v550, %v614
        %v616 = vpop.f32.mrb[0].mxu0
        %v617 = vpop.f32.mrb[0].mxu0
        %v618 = vadd.f32 %v550, %v617
        %v619 = vpop.f32.mrb[0].mxu0
        %620 = vmatprep.mubr.bf16.mxu0 0
        %621 = vmatmul.mubr.bf16.gmra.mrb[0].mxu0 %v578
        %v622 = vpop.f32.mrb[0].mxu0
        %v623 = vadd.f32 %v550, %v622
        %v624 = vpop.f32.mrb[0].mxu0
        %v625 = vpop.f32.mrb[0].mxu0
        %v626 = vadd.f32 %v550, %v625
        %v627 = vpop.f32.mrb[0].mxu0
        %628 = vdwg.mxu0
        %629 = vst [vmem:[#allocation3] sm:$0xff] %v615
        %630 = vst [vmem:[#allocation3 + $0x8] sm:$0xff] %v618
        %631 = vst [vmem:[#allocation3 + $0x10] sm:$0xff] %v623
        %632 = vst [vmem:[#allocation3 + $0x18] sm:$0xff] %v626
        %v633 = vld [vmem:[%s6] sm:$0xff]
        %v634 = vld [vmem:[%s6 + $0x8] sm:$0xff]
        %v635 = vld [vmem:[%s6 + $0x10] sm:$0xff]
        %v636 = vld [vmem:[%s6 + $0x18] sm:$0xff]
        %v637 = vld [vmem:[%s6 + $0x20] sm:$0xff]
        %v638 = vld [vmem:[%s6 + $0x28] sm:$0xff]
        %v639 = vld [vmem:[%s6 + $0x30] sm:$0xff]
        %v640 = vld [vmem:[%s6 + $0x38] sm:$0xff]
        %v641 = vld [vmem:[%s7] sm:$0x1]
        %v643 = vlaneseq
        %v644 = vshrl.u32 %v643, 7
        %v645 = vsub.s32 0, %v644
        %v646 = vrot.slane %v641, %v645
        %v647 = vld [vmem:[#allocation4] sm:$0xff]
        %v648 = vld [vmem:[#allocation5] sm:$0xff]
        %v649 = vld [vmem:[#allocation6] sm:$0xff]
        %v650 = vld [vmem:[#allocation2] sm:$0xff]
        %s651 = scalar_lea.vmem [#allocation3], 24
        %v652 = vld [vmem:[%s651] sm:$0xff]
        %v653 = vpack.c.bf16 %v647, %v647
        %v662 = vunpack.c.l.b16 %v633
        %v663 = vunpack.c.h.b16 %v633
        %v664 = vunpack.c.l.b16 %v634
        %v665 = vunpack.c.h.b16 %v634
        %v666 = vunpack.c.l.b16 %v635
        %v667 = vunpack.c.h.b16 %v635
        %v668 = vunpack.c.l.b16 %v636
        %v669 = vunpack.c.h.b16 %v636
        %v670 = vunpack.c.l.b16 %v637
        %v671 = vunpack.c.h.b16 %v637
        %v672 = vunpack.c.l.b16 %v638
        %v673 = vunpack.c.h.b16 %v638
        %v674 = vunpack.c.l.b16 %v639
        %v675 = vunpack.c.h.b16 %v639
        %v676 = vunpack.c.l.b16 %v640
        %v677 = vunpack.c.h.b16 %v640
        %v678 = vpack.c.b16 %v664, %v662
        %v679 = vpack.c.b16 %v665, %v663
        %v680 = vpack.c.b16 %v668, %v666
        %v681 = vpack.c.b16 %v669, %v667
        %v682 = vpack.c.b16 %v672, %v670
        %v683 = vpack.c.b16 %v673, %v671
        %v684 = vpack.c.b16 %v676, %v674
        %v685 = vpack.c.b16 %v677, %v675
        %vm694 = vcmask 523264
        %v696 = vsel %vm694, %v653, 0
        %698 = vmatprep.subr.bf16.mxu0 %v679
        %699 = vmatpush1.bf16.msra.mxu0 %v678
        %700 = vmatprep.subr.bf16.mxu0 %v681
        %701 = vmatpush1.bf16.msra.mxu0 %v680
        %702 = vmatprep.subr.bf16.mxu0 %v683
        %703 = vmatpush1.bf16.msra.mxu0 %v682
        %704 = vmatprep.subr.bf16.mxu0 %v685
        %705 = vmatpush1.bf16.msra.mxu0 %v684
        %706 = vmatprep.subr.bf16.mxu0 0
        %707 = vmatpush1.bf16.msra.mxu0 0
        %708 = vmatprep.subr.bf16.mxu0 0
        %709 = vmatpush1.bf16.msra.mxu0 0
        %710 = vmatprep.subr.bf16.mxu0 0
        %711 = vmatpush1.bf16.msra.mxu0 0
        %712 = vmatprep.subr.bf16.mxu0 0
        %713 = vmatpush1.bf16.msra.mxu0 0
        %714 = vmatprep.subr.bf16.mxu0 0
        %715 = vmatpush1.bf16.msra.mxu0 0
        %716 = vmatprep.subr.bf16.mxu0 0
        %717 = vmatpush1.bf16.msra.mxu0 0
        %718 = vmatprep.subr.bf16.mxu0 0
        %719 = vmatpush1.bf16.msra.mxu0 0
        %720 = vmatprep.subr.bf16.mxu0 0
        %721 = vmatpush1.bf16.msra.mxu0 0
        %722 = vmatprep.subr.bf16.mxu0 0
        %723 = vmatpush1.bf16.msra.mxu0 0
        %724 = vmatprep.subr.bf16.mxu0 0
        %725 = vmatpush1.bf16.msra.mxu0 0
        %726 = vmatprep.subr.bf16.mxu0 0
        %727 = vmatpush1.bf16.msra.mxu0 0
        %728 = vmatprep.subr.bf16.mxu0 0
        %729 = vmatpush1.bf16.msra.mxu0 0
        %730 = vmatprep.mubr.bf16.mxu0 0
        %731 = vmatmul.mubr.bf16.gmra.mrb[0].mxu0 %v696
        %v732 = vpop.f32.mrb[0].mxu0
        %v733 = vadd.f32 0.0, %v732
        %v734 = vpop.f32.mrb[0].mxu0
        %v735 = vadd.f32 0.0, %v734
        %v736 = vpop.f32.mrb[0].mxu0
        %v737 = vpop.f32.mrb[0].mxu0
        %738 = vdwg.mxu0
        %v739 = vadd.f32 %v650, %v733
        %v740 = vxor.u32 %v739, 2147483648
        %v741 = vmul.f32 %v740, 1.442695
        %v742 = vpow.pop %v741
        %v743 = vadd.f32 %v742, 1.0
        %v744 = vrcp.pop %v743
        %v745 = vmul.f32 1.0, %v744
        %v746 = vadd.f32 %v652, %v735
        %v747 = vxor.u32 %v746, 2147483648
        %v748 = vmul.f32 %v747, 1.442695
        %v749 = vpow.pop %v748
        %v750 = vadd.f32 %v749, 1.0
        %v751 = vrcp.pop %v750
        %v752 = vmul.f32 1.0, %v751
        %753 = vrot.lane.b32.xlu0 %v646, 64
        %v754 = vpop.permute.xlu0 %753
        %v756 = vadd.f32 %v733, %v754
        %758 = vrot.lane.b32.xlu0 %v756, 64
        %v759 = vpop.permute.xlu0 %758
        %v761 = vmul.f32 %v745, %v759
        %763 = vrot.lane.b32.xlu0 %v761, 64
        %v764 = vpop.permute.xlu0 %763
        %v766 = vadd.f32 %v650, %v764
        %v767 = vtanh.pop %v766
        %768 = vrot.lane.b32.xlu0 %v646, 32
        %v769 = vpop.permute.xlu0 %768
        %v771 = vadd.f32 %v735, %v769
        %773 = vrot.lane.b32.xlu0 %v771, 64
        %v774 = vpop.permute.xlu0 %773
        %v776 = vmul.f32 %v752, %v774
        %778 = vrot.lane.b32.xlu0 %v776, 64
        %v779 = vpop.permute.xlu0 %778
        %v781 = vadd.f32 %v652, %v779
        %v782 = vtanh.pop %v781
        %v783 = vsub.f32 1.0, %v745
        %785 = vrot.lane.b32.xlu0 %v767, 96
        %v786 = vpop.permute.xlu0 %785
        %v788 = vmul.f32 %v783, %v786
        %790 = vrot.lane.b32.xlu0 %v647, 32
        %v791 = vpop.permute.xlu0 %790
        %v793 = vmul.f32 %v745, %v791
        %v794 = vadd.f32 %v788, %v793
        %v795 = vsub.f32 1.0, %v752
        %797 = vrot.lane.b32.xlu0 %v782, 96
        %v798 = vpop.permute.xlu0 %797
        %v800 = vmul.f32 %v795, %v798
        %v801 = vmul.f32 %v752, %v647
        %v802 = vadd.f32 %v800, %v801
        %804 = vrot.lane.b32.xlu0 %v794, 96
        %v805 = vpop.permute.xlu0 %804
        %v807 = vsel %vm477, %v805, %v802
        %v808 = vadd.f32 %v648, %v807
        %v809 = vmax.f32 %v649, %v807
        %s810 = scalar_lea.vmem [#allocation2], 8
        %v811 = vld [vmem:[%s810] sm:$0xff]
        %s812 = scalar_lea.vmem [#allocation3], 16
        %v813 = vld [vmem:[%s812] sm:$0xff]
        %v814 = vpack.c.bf16 %v807, %v807
        %v816 = vsel %vm694, %v814, 0
        %818 = vmatprep.subr.bf16.mxu0 %v679
        %819 = vmatpush1.bf16.msra.mxu0 %v678
        %820 = vmatprep.subr.bf16.mxu0 %v681
        %821 = vmatpush1.bf16.msra.mxu0 %v680
        %822 = vmatprep.subr.bf16.mxu0 %v683
        %823 = vmatpush1.bf16.msra.mxu0 %v682
        %824 = vmatprep.subr.bf16.mxu0 %v685
        %825 = vmatpush1.bf16.msra.mxu0 %v684
        %826 = vmatprep.subr.bf16.mxu0 0
        %827 = vmatpush1.bf16.msra.mxu0 0
        %828 = vmatprep.subr.bf16.mxu0 0
        %829 = vmatpush1.bf16.msra.mxu0 0
        %830 = vmatprep.subr.bf16.mxu0 0
        %831 = vmatpush1.bf16.msra.mxu0 0
        %832 = vmatprep.subr.bf16.mxu0 0
        %833 = vmatpush1.bf16.msra.mxu0 0
        %834 = vmatprep.subr.bf16.mxu0 0
        %835 = vmatpush1.bf16.msra.mxu0 0
        %836 = vmatprep.subr.bf16.mxu0 0
        %837 = vmatpush1.bf16.msra.mxu0 0
        %838 = vmatprep.subr.bf16.mxu0 0
        %839 = vmatpush1.bf16.msra.mxu0 0
        %840 = vmatprep.subr.bf16.mxu0 0
        %841 = vmatpush1.bf16.msra.mxu0 0
        %842 = vmatprep.subr.bf16.mxu0 0
        %843 = vmatpush1.bf16.msra.mxu0 0
        %844 = vmatprep.subr.bf16.mxu0 0
        %845 = vmatpush1.bf16.msra.mxu0 0
        %846 = vmatprep.subr.bf16.mxu0 0
        %847 = vmatpush1.bf16.msra.mxu0 0
        %848 = vmatprep.subr.bf16.mxu0 0
        %849 = vmatpush1.bf16.msra.mxu0 0
        %850 = vmatprep.mubr.bf16.mxu0 0
        %851 = vmatmul.mubr.bf16.gmra.mrb[0].mxu0 %v816
        %v852 = vpop.f32.mrb[0].mxu0
        %v853 = vadd.f32 0.0, %v852
        %v854 = vpop.f32.mrb[0].mxu0
        %v855 = vadd.f32 0.0, %v854
        %v856 = vpop.f32.mrb[0].mxu0
        %v857 = vpop.f32.mrb[0].mxu0
        %858 = vdwg.mxu0
        %v859 = vadd.f32 %v811, %v853
        %v860 = vxor.u32 %v859, 2147483648
        %v861 = vmul.f32 %v860, 1.442695
        %v862 = vpow.pop %v861
        %v863 = vadd.f32 %v862, 1.0
        %v864 = vrcp.pop %v863
        %v865 = vmul.f32 1.0, %v864
        %v866 = vadd.f32 %v813, %v855
        %v867 = vxor.u32 %v866, 2147483648
        %v868 = vmul.f32 %v867, 1.442695
        %v869 = vpow.pop %v868
        %v870 = vadd.f32 %v869, 1.0
        %v871 = vrcp.pop %v870
        %v872 = vmul.f32 1.0, %v871
        %v873 = vadd.f32 %v853, %v754
        %875 = vrot.lane.b32.xlu0 %v873, 64
        %v876 = vpop.permute.xlu0 %875
        %v878 = vmul.f32 %v865, %v876
        %880 = vrot.lane.b32.xlu0 %v878, 64
        %v881 = vpop.permute.xlu0 %880
        %v883 = vadd.f32 %v811, %v881
        %v884 = vtanh.pop %v883
        %v885 = vadd.f32 %v855, %v769
        %887 = vrot.lane.b32.xlu0 %v885, 64
        %v888 = vpop.permute.xlu0 %887
        %v890 = vmul.f32 %v872, %v888
        %892 = vrot.lane.b32.xlu0 %v890, 64
        %v893 = vpop.permute.xlu0 %892
        %v895 = vadd.f32 %v813, %v893
        %v896 = vtanh.pop %v895
        %v897 = vsub.f32 1.0, %v865
        %899 = vrot.lane.b32.xlu0 %v884, 96
        %v900 = vpop.permute.xlu0 %899
        %v902 = vmul.f32 %v897, %v900
        %904 = vrot.lane.b32.xlu0 %v807, 32
        %v905 = vpop.permute.xlu0 %904
        %v907 = vmul.f32 %v865, %v905
        %v908 = vadd.f32 %v902, %v907
        %v909 = vsub.f32 1.0, %v872
        %911 = vrot.lane.b32.xlu0 %v896, 96
        %v912 = vpop.permute.xlu0 %911
        %v914 = vmul.f32 %v909, %v912
        %v915 = vmul.f32 %v872, %v807
        %v916 = vadd.f32 %v914, %v915
        %918 = vrot.lane.b32.xlu0 %v908, 96
        %v919 = vpop.permute.xlu0 %918
        %v921 = vsel %vm477, %v919, %v916
        %v922 = vadd.f32 %v808, %v921
        %v923 = vmax.f32 %v809, %v921
        %s924 = scalar_lea.vmem [#allocation2], 16
        %v925 = vld [vmem:[%s924] sm:$0xff]
        %s926 = scalar_lea.vmem [#allocation3], 8
        %v927 = vld [vmem:[%s926] sm:$0xff]
        %v928 = vpack.c.bf16 %v921, %v921
        %v930 = vsel %vm694, %v928, 0
        %932 = vmatprep.subr.bf16.mxu0 %v679
        %933 = vmatpush1.bf16.msra.mxu0 %v678
        %934 = vmatprep.subr.bf16.mxu0 %v681
        %935 = vmatpush1.bf16.msra.mxu0 %v680
        %936 = vmatprep.subr.bf16.mxu0 %v683
        %937 = vmatpush1.bf16.msra.mxu0 %v682
        %938 = vmatprep.subr.bf16.mxu0 %v685
        %939 = vmatpush1.bf16.msra.mxu0 %v684
        %940 = vmatprep.subr.bf16.mxu0 0
        %941 = vmatpush1.bf16.msra.mxu0 0
        %942 = vmatprep.subr.bf16.mxu0 0
        %943 = vmatpush1.bf16.msra.mxu0 0
        %944 = vmatprep.subr.bf16.mxu0 0
        %945 = vmatpush1.bf16.msra.mxu0 0
        %946 = vmatprep.subr.bf16.mxu0 0
        %947 = vmatpush1.bf16.msra.mxu0 0
        %948 = vmatprep.subr.bf16.mxu0 0
        %949 = vmatpush1.bf16.msra.mxu0 0
        %950 = vmatprep.subr.bf16.mxu0 0
        %951 = vmatpush1.bf16.msra.mxu0 0
        %952 = vmatprep.subr.bf16.mxu0 0
        %953 = vmatpush1.bf16.msra.mxu0 0
        %954 = vmatprep.subr.bf16.mxu0 0
        %955 = vmatpush1.bf16.msra.mxu0 0
        %956 = vmatprep.subr.bf16.mxu0 0
        %957 = vmatpush1.bf16.msra.mxu0 0
        %958 = vmatprep.subr.bf16.mxu0 0
        %959 = vmatpush1.bf16.msra.mxu0 0
        %960 = vmatprep.subr.bf16.mxu0 0
        %961 = vmatpush1.bf16.msra.mxu0 0
        %962 = vmatprep.subr.bf16.mxu0 0
        %963 = vmatpush1.bf16.msra.mxu0 0
        %964 = vmatprep.mubr.bf16.mxu0 0
        %965 = vmatmul.mubr.bf16.gmra.mrb[0].mxu0 %v930
        %v966 = vpop.f32.mrb[0].mxu0
        %v967 = vadd.f32 0.0, %v966
        %v968 = vpop.f32.mrb[0].mxu0
        %v969 = vadd.f32 0.0, %v968
        %v970 = vpop.f32.mrb[0].mxu0
        %v971 = vpop.f32.mrb[0].mxu0
        %972 = vdwg.mxu0
        %v973 = vadd.f32 %v925, %v967
        %v974 = vxor.u32 %v973, 2147483648
        %v975 = vmul.f32 %v974, 1.442695
        %v976 = vpow.pop %v975
        %v977 = vadd.f32 %v976, 1.0
        %v978 = vrcp.pop %v977
        %v979 = vmul.f32 1.0, %v978
        %v980 = vadd.f32 %v927, %v969
        %v981 = vxor.u32 %v980, 2147483648
        %v982 = vmul.f32 %v981, 1.442695
        %v983 = vpow.pop %v982
        %v984 = vadd.f32 %v983, 1.0
        %v985 = vrcp.pop %v984
        %v986 = vmul.f32 1.0, %v985
        %v987 = vadd.f32 %v967, %v754
        %989 = vrot.lane.b32.xlu0 %v987, 64
        %v990 = vpop.permute.xlu0 %989
        %v992 = vmul.f32 %v979, %v990
        %994 = vrot.lane.b32.xlu0 %v992, 64
        %v995 = vpop.permute.xlu0 %994
        %v997 = vadd.f32 %v925, %v995
        %v998 = vtanh.pop %v997
        %v999 = vadd.f32 %v969, %v769
        %1001 = vrot.lane.b32.xlu0 %v999, 64
        %v1002 = vpop.permute.xlu0 %1001
        %v1004 = vmul.f32 %v986, %v1002
        %1006 = vrot.lane.b32.xlu0 %v1004, 64
        %v1007 = vpop.permute.xlu0 %1006
        %v1009 = vadd.f32 %v927, %v1007
        %v1010 = vtanh.pop %v1009
        %v1011 = vsub.f32 1.0, %v979
        %1013 = vrot.lane.b32.xlu0 %v998, 96
        %v1014 = vpop.permute.xlu0 %1013
        %v1016 = vmul.f32 %v1011, %v1014
        %1018 = vrot.lane.b32.xlu0 %v921, 32
        %v1019 = vpop.permute.xlu0 %1018
        %v1021 = vmul.f32 %v979, %v1019
        %v1022 = vadd.f32 %v1016, %v1021
        %v1023 = vsub.f32 1.0, %v986
        %1025 = vrot.lane.b32.xlu0 %v1010, 96
        %v1026 = vpop.permute.xlu0 %1025
        %v1028 = vmul.f32 %v1023, %v1026
        %v1029 = vmul.f32 %v986, %v921
        %v1030 = vadd.f32 %v1028, %v1029
        %1032 = vrot.lane.b32.xlu0 %v1022, 96
        %v1033 = vpop.permute.xlu0 %1032
        %v1035 = vsel %vm477, %v1033, %v1030
        %v1036 = vadd.f32 %v922, %v1035
        %v1037 = vmax.f32 %v923, %v1035
        %s1038 = scalar_lea.vmem [#allocation2], 24
        %v1039 = vld [vmem:[%s1038] sm:$0xff]
        %v1040 = vld [vmem:[#allocation3] sm:$0xff]
        %v1041 = vpack.c.bf16 %v1035, %v1035
        %v1043 = vsel %vm694, %v1041, 0
        %1045 = vmatprep.subr.bf16.mxu0 %v679
        %1046 = vmatpush1.bf16.msra.mxu0 %v678
        %1047 = vmatprep.subr.bf16.mxu0 %v681
        %1048 = vmatpush1.bf16.msra.mxu0 %v680
        %1049 = vmatprep.subr.bf16.mxu0 %v683
        %1050 = vmatpush1.bf16.msra.mxu0 %v682
        %1051 = vmatprep.subr.bf16.mxu0 %v685
        %1052 = vmatpush1.bf16.msra.mxu0 %v684
        %1053 = vmatprep.subr.bf16.mxu0 0
        %1054 = vmatpush1.bf16.msra.mxu0 0
        %1055 = vmatprep.subr.bf16.mxu0 0
        %1056 = vmatpush1.bf16.msra.mxu0 0
        %1057 = vmatprep.subr.bf16.mxu0 0
        %1058 = vmatpush1.bf16.msra.mxu0 0
        %1059 = vmatprep.subr.bf16.mxu0 0
        %1060 = vmatpush1.bf16.msra.mxu0 0
        %1061 = vmatprep.subr.bf16.mxu0 0
        %1062 = vmatpush1.bf16.msra.mxu0 0
        %1063 = vmatprep.subr.bf16.mxu0 0
        %1064 = vmatpush1.bf16.msra.mxu0 0
        %1065 = vmatprep.subr.bf16.mxu0 0
        %1066 = vmatpush1.bf16.msra.mxu0 0
        %1067 = vmatprep.subr.bf16.mxu0 0
        %1068 = vmatpush1.bf16.msra.mxu0 0
        %1069 = vmatprep.subr.bf16.mxu0 0
        %1070 = vmatpush1.bf16.msra.mxu0 0
        %1071 = vmatprep.subr.bf16.mxu0 0
        %1072 = vmatpush1.bf16.msra.mxu0 0
        %1073 = vmatprep.subr.bf16.mxu0 0
        %1074 = vmatpush1.bf16.msra.mxu0 0
        %1075 = vmatprep.subr.bf16.mxu0 0
        %1076 = vmatpush1.bf16.msra.mxu0 0
        %1077 = vmatprep.mubr.bf16.mxu0 0
        %1078 = vmatmul.mubr.bf16.gmra.mrb[0].mxu0 %v1043
        %v1079 = vpop.f32.mrb[0].mxu0
        %v1080 = vadd.f32 0.0, %v1079
        %v1081 = vpop.f32.mrb[0].mxu0
        %v1082 = vadd.f32 0.0, %v1081
        %v1083 = vpop.f32.mrb[0].mxu0
        %v1084 = vpop.f32.mrb[0].mxu0
        %1085 = vdwg.mxu0
        %v1086 = vadd.f32 %v1039, %v1080
        %v1087 = vxor.u32 %v1086, 2147483648
        %v1088 = vmul.f32 %v1087, 1.442695
        %v1089 = vpow.pop %v1088
        %v1090 = vadd.f32 %v1089, 1.0
        %v1091 = vrcp.pop %v1090
        %v1092 = vmul.f32 1.0, %v1091
        %v1093 = vadd.f32 %v1040, %v1082
        %v1094 = vxor.u32 %v1093, 2147483648
        %v1095 = vmul.f32 %v1094, 1.442695
        %v1096 = vpow.pop %v1095
        %v1097 = vadd.f32 %v1096, 1.0
        %v1098 = vrcp.pop %v1097
        %v1099 = vmul.f32 1.0, %v1098
        %v1100 = vadd.f32 %v1080, %v754
        %1102 = vrot.lane.b32.xlu0 %v1100, 64
        %v1103 = vpop.permute.xlu0 %1102
        %v1105 = vmul.f32 %v1092, %v1103
        %1107 = vrot.lane.b32.xlu0 %v1105, 64
        %v1108 = vpop.permute.xlu0 %1107
        %v1110 = vadd.f32 %v1039, %v1108
        %v1111 = vtanh.pop %v1110
        %v1112 = vadd.f32 %v1082, %v769
        %1114 = vrot.lane.b32.xlu0 %v1112, 64
        %v1115 = vpop.permute.xlu0 %1114
        %v1117 = vmul.f32 %v1099, %v1115
        %1119 = vrot.lane.b32.xlu0 %v1117, 64
        %v1120 = vpop.permute.xlu0 %1119
        %v1122 = vadd.f32 %v1040, %v1120
        %v1123 = vtanh.pop %v1122
        %v1124 = vsub.f32 1.0, %v1092
        %1126 = vrot.lane.b32.xlu0 %v1111, 96
        %v1127 = vpop.permute.xlu0 %1126
        %v1129 = vmul.f32 %v1124, %v1127
        %1131 = vrot.lane.b32.xlu0 %v1035, 32
        %v1132 = vpop.permute.xlu0 %1131
        %v1134 = vmul.f32 %v1092, %v1132
        %v1135 = vadd.f32 %v1129, %v1134
        %v1136 = vsub.f32 1.0, %v1099
        %1138 = vrot.lane.b32.xlu0 %v1123, 96
        %v1139 = vpop.permute.xlu0 %1138
        %v1141 = vmul.f32 %v1136, %v1139
        %v1142 = vmul.f32 %v1099, %v1035
        %v1143 = vadd.f32 %v1141, %v1142
        %1145 = vrot.lane.b32.xlu0 %v1135, 96
        %v1146 = vpop.permute.xlu0 %1145
        %v1148 = vsel %vm477, %v1146, %v1143
        %v1149 = vadd.f32 %v1036, %v1148
        %v1150 = vmax.f32 %v1037, %v1148
        %1151 = vst.msk [vmem:[#allocation4] sm:$0xff] %vm694, %v1148
        %1152 = vst.msk [vmem:[#allocation5] sm:$0xff] %vm694, %v1149
        %1153 = vst.msk [vmem:[#allocation6] sm:$0xff] %vm694, %v1150
        %p1154 = scmp.eq.s32.totalorder %s24, 1
        // Predicated region
        $region73: #{tpu_custom_call.1} parent=67 // pred_check
          %p1155 = pneg %p1154
        $region74: #{tpu_custom_call.1} parent=67 // pred_check_branch
          %1157 = sbr.rel (%p1155) target = $region76
        $region75: #{tpu_custom_call.1} parent=67 // pred_region
          %v1158 = vld [vmem:[#allocation5] sm:$0xff]
          %v1159 = vmul.f32 %v1158, 0.125
          %v1160 = vpack.c.bf16 %v1159, %v1159
          %v1161 = vld [vmem:[%s8] sm:$0xf]
          %v1162 = vld [vmem:[%s8 + $0x4] sm:$0xf]
          %v1163 = vld [vmem:[%s8 + $0x8] sm:$0xf]
          %v1164 = vld [vmem:[%s8 + $0xc] sm:$0xf]
          %v1165 = vld [vmem:[%s8 + $0x10] sm:$0xf]
          %v1166 = vld [vmem:[%s8 + $0x14] sm:$0xf]
          %v1167 = vld [vmem:[%s8 + $0x18] sm:$0xf]
          %v1168 = vld [vmem:[%s8 + $0x1c] sm:$0xf]
          %v1169 = vld [vmem:[#allocation6] sm:$0xff]
          %v1170 = vpack.c.bf16 %v1169, %v1169
          %v1171 = vld [vmem:[%s9] sm:$0xf]
          %v1172 = vld [vmem:[%s9 + $0x4] sm:$0xf]
          %v1173 = vld [vmem:[%s9 + $0x8] sm:$0xf]
          %v1174 = vld [vmem:[%s9 + $0xc] sm:$0xf]
          %v1175 = vld [vmem:[%s9 + $0x10] sm:$0xf]
          %v1176 = vld [vmem:[%s9 + $0x14] sm:$0xf]
          %v1177 = vld [vmem:[%s9 + $0x18] sm:$0xf]
          %v1178 = vld [vmem:[%s9 + $0x1c] sm:$0xf]
          %v1187 = vunpack.c.l.b16 %v1171
          %v1188 = vunpack.c.l.b16 %v1172
          %v1189 = vunpack.c.l.b16 %v1173
          %v1190 = vunpack.c.l.b16 %v1174
          %v1191 = vunpack.c.l.b16 %v1175
          %v1192 = vunpack.c.l.b16 %v1176
          %v1193 = vunpack.c.l.b16 %v1177
          %v1194 = vunpack.c.l.b16 %v1178
          %v1195 = vpack.c.b16 %v1188, %v1187
          %v1196 = vpack.c.b16 %v1190, %v1189
          %v1197 = vpack.c.b16 %v1192, %v1191
          %v1198 = vpack.c.b16 %v1194, %v1193
          %v1204 = vsel %vm694, %v1170, 0
          %1206 = vmatprep.subr.bf16.mxu0 0
          %1207 = vmatpush1.bf16.msra.mxu0 %v1195
          %1208 = vmatprep.subr.bf16.mxu0 0
          %1209 = vmatpush1.bf16.msra.mxu0 %v1196
          %1210 = vmatprep.subr.bf16.mxu0 0
          %1211 = vmatpush1.bf16.msra.mxu0 %v1197
          %1212 = vmatprep.subr.bf16.mxu0 0
          %1213 = vmatpush1.bf16.msra.mxu0 %v1198
          %1214 = vmatprep.subr.bf16.mxu0 0
          %1215 = vmatpush1.bf16.msra.mxu0 0
          %1216 = vmatprep.subr.bf16.mxu0 0
          %1217 = vmatpush1.bf16.msra.mxu0 0
          %1218 = vmatprep.subr.bf16.mxu0 0
          %1219 = vmatpush1.bf16.msra.mxu0 0
          %1220 = vmatprep.subr.bf16.mxu0 0
          %1221 = vmatpush1.bf16.msra.mxu0 0
          %1222 = vmatprep.subr.bf16.mxu0 0
          %1223 = vmatpush1.bf16.msra.mxu0 0
          %1224 = vmatprep.subr.bf16.mxu0 0
          %1225 = vmatpush1.bf16.msra.mxu0 0
          %1226 = vmatprep.subr.bf16.mxu0 0
          %1227 = vmatpush1.bf16.msra.mxu0 0
          %1228 = vmatprep.subr.bf16.mxu0 0
          %1229 = vmatpush1.bf16.msra.mxu0 0
          %1230 = vmatprep.subr.bf16.mxu0 0
          %1231 = vmatpush1.bf16.msra.mxu0 0
          %1232 = vmatprep.subr.bf16.mxu0 0
          %1233 = vmatpush1.bf16.msra.mxu0 0
          %1234 = vmatprep.subr.bf16.mxu0 0
          %1235 = vmatpush1.bf16.msra.mxu0 0
          %1236 = vmatprep.subr.bf16.mxu0 0
          %1237 = vmatpush1.bf16.msra.mxu0 0
          %1238 = vmatprep.mubr.bf16.mxu0 0
          %1239 = vmatmul.mubr.bf16.gmra.mrb[0].mxu0 %v1204
          %v1240 = vpop.f32.mrb[0].mxu0
          %v1241 = vadd.f32 0.0, %v1240
          %v1242 = vpop.f32.mrb[0].mxu0
          %v1243 = vpop.f32.mrb[0].mxu0
          %v1244 = vpop.f32.mrb[0].mxu0
          %1245 = vdwg.mxu0
          %v1254 = vunpack.c.l.b16 %v1161
          %v1255 = vunpack.c.l.b16 %v1162
          %v1256 = vunpack.c.l.b16 %v1163
          %v1257 = vunpack.c.l.b16 %v1164
          %v1258 = vunpack.c.l.b16 %v1165
          %v1259 = vunpack.c.l.b16 %v1166
          %v1260 = vunpack.c.l.b16 %v1167
          %v1261 = vunpack.c.l.b16 %v1168
          %v1262 = vpack.c.b16 %v1255, %v1254
          %v1263 = vpack.c.b16 %v1257, %v1256
          %v1264 = vpack.c.b16 %v1259, %v1258
          %v1265 = vpack.c.b16 %v1261, %v1260
          %v1271 = vsel %vm694, %v1160, 0
          %1273 = vmatprep.subr.bf16.mxu0 0
          %1274 = vmatpush1.bf16.msra.mxu0 %v1262
          %1275 = vmatprep.subr.bf16.mxu0 0
          %1276 = vmatpush1.bf16.msra.mxu0 %v1263
          %1277 = vmatprep.subr.bf16.mxu0 0
          %1278 = vmatpush1.bf16.msra.mxu0 %v1264
          %1279 = vmatprep.subr.bf16.mxu0 0
          %1280 = vmatpush1.bf16.msra.mxu0 %v1265
          %1281 = vmatprep.subr.bf16.mxu0 0
          %1282 = vmatpush1.bf16.msra.mxu0 0
          %1283 = vmatprep.subr.bf16.mxu0 0
          %1284 = vmatpush1.bf16.msra.mxu0 0
          %1285 = vmatprep.subr.bf16.mxu0 0
          %1286 = vmatpush1.bf16.msra.mxu0 0
          %1287 = vmatprep.subr.bf16.mxu0 0
          %1288 = vmatpush1.bf16.msra.mxu0 0
          %1289 = vmatprep.subr.bf16.mxu0 0
          %1290 = vmatpush1.bf16.msra.mxu0 0
          %1291 = vmatprep.subr.bf16.mxu0 0
          %1292 = vmatpush1.bf16.msra.mxu0 0
          %1293 = vmatprep.subr.bf16.mxu0 0
          %1294 = vmatpush1.bf16.msra.mxu0 0
          %1295 = vmatprep.subr.bf16.mxu0 0
          %1296 = vmatpush1.bf16.msra.mxu0 0
          %1297 = vmatprep.subr.bf16.mxu0 0
          %1298 = vmatpush1.bf16.msra.mxu0 0
          %1299 = vmatprep.subr.bf16.mxu0 0
          %1300 = vmatpush1.bf16.msra.mxu0 0
          %1301 = vmatprep.subr.bf16.mxu0 0
          %1302 = vmatpush1.bf16.msra.mxu0 0
          %1303 = vmatprep.subr.bf16.mxu0 0
          %1304 = vmatpush1.bf16.msra.mxu0 0
          %1305 = vmatprep.mubr.bf16.mxu0 0
          %1306 = vmatmul.mubr.bf16.gmra.mrb[0].mxu0 %v1271
          %v1307 = vpop.f32.mrb[0].mxu0
          %v1308 = vadd.f32 %v1241, %v1307
          %v1309 = vpop.f32.mrb[0].mxu0
          %v1310 = vpop.f32.mrb[0].mxu0
          %v1311 = vpop.f32.mrb[0].mxu0
          %1312 = vdwg.mxu0
          %v1313 = vld [vmem:[%s10] sm:$0x1]
          %v1315 = vlaneseq
          %v1316 = vshrl.u32 %v1315, 7
          %v1317 = vsub.s32 0, %v1316
          %v1318 = vrot.slane %v1313, %v1317
          %v1320 = vadd.f32 %v1308, %v1318
          %v1321 = vld [vmem:[%s11] sm:$0xff]
          %v1322 = vmul.f32 %v1320, 0.5
          %v1323 = vmul.f32 %v1322, 1.442695
          %v1324 = vpow.pop %v1323
          %1326 = vrot.lane.b32.xlu0 %v1324, 112
          %v1327 = vpop.permute.xlu0 %1326
          %v1329 = vmul.f32 %v1321, %v1327
          %v1330 = vadd.f32 %v1320, %v1329
          %1331 = vst.msk [vmem:[#allocation7] sm:$0xff] %vm477, %v1320
          %1333 = vrot.lane.b32.xlu0 %v1330, 32
          %v1334 = vpop.permute.xlu0 %1333
          %vm1336 = vcmask 392448
          %1337 = vst.msk [vmem:[#allocation7] sm:$0xff] %vm1336, %v1334
        $region76: #{tpu_custom_call.1} parent=67 // pred_fallthru
          _
        // Predicated region
        $region77: #{tpu_custom_call.1} parent=67 // pred_check
          %p1338 = pneg %p301
        $region78: #{tpu_custom_call.1} parent=67 // pred_check_branch
          %1340 = sbr.rel (%p1338) target = $region80
        $region79: #{tpu_custom_call.1} parent=67 // pred_region
          %s1342 = ssub.s32 128, 128
          %1343 = vsyncadd [#allocation8], %s1342
          %s1345 = sshll.u32 [#allocation7], 4
          %s1346 = int_to_ptr.vmem [resolvable:$true] %s1345
          %1348 = dma.vmem_to_hbm [thread:$0]  %s1346, 128, %s12, [#allocation8]
        $region80: #{tpu_custom_call.1} parent=67 // pred_fallthru
          _
        // Predicated region
        $region81: #{tpu_custom_call.1} parent=67 // pred_check
          %p1349 = pneg %p301
        $region82: #{tpu_custom_call.1} parent=67 // pred_check_branch
          %1351 = sbr.rel (%p1349) target = $region84
        $region83: #{tpu_custom_call.1} parent=67 // pred_region
          %1352 = dma.done [#allocation8], 128
        $region84: #{tpu_custom_call.1} parent=67 // pred_fallthru
          _
      $region68: #{tpu_custom_call.1} parent=5 // pred_fallthru
        _
      %p1353 = scmp.le.s32.totalorder 2, %s19
      // Predicated region
      $region85: #{tpu_custom_call.1} parent=5 // pred_check
        %p1354 = pneg %p1353
      $region86: #{tpu_custom_call.1} parent=5 // pred_check_branch
        %1356 = sbr.rel (%p1354) target = $region88
      $region87: #{tpu_custom_call.1} parent=5 // pred_region
        %s1357 = ssub.s32 %s19, 2
      $region88: #{tpu_custom_call.1} parent=5 // pred_fallthru
        _
    $region6: #{tpu_custom_call.1} parent=1 // loop_footer
      %s23 = sadd.s32 1, %s19
    $region7: #{tpu_custom_call.1} parent=1 // loop_footer_branch
      %18 = sbr.rel target = $region3
    $region8: #{tpu_custom_call.1} parent=1 // loop_exit
      _
    %1358 = vsyncpa [#allocation8], 1
    %s1359 = scalar_lea.sflag [#allocation8], 1
    %1360 = vsyncpa %s1359, 1

</llo_original>
